<compile_context>
chip_gen: v7x
topology: tpu7x:2x2x1
jax: 0.10.0
libtpu: 0.0.40
codegen_flags: <defaults>
</compile_context>

<pallas_src>
import functools

import jax
import jax.numpy as jnp
from jax import lax
from jax.experimental import pallas as pl
from jax.experimental.pallas import tpu as pltpu


def _smooth_l1(x):
    ax = jnp.abs(x)
    return jnp.where(ax < 1.0, 0.5 * x * x, ax - 0.5)


def _ssd_loss_kernel(const_ref, ploc_ref, plabel_ref, gloc_ref, glabel_ref,
                     out_ref, *, d_orig, strip):
    f32 = jnp.float32
    B = ploc_ref.shape[0]          # batch elements per grid step
    D = ploc_ref.shape[2]          # padded #default boxes (multiple of 128)
    n_strips = D // strip

    # hoisted constants / iotas (shared by every batch element in the tile)
    c = const_ref[0]               # (8, D)
    A = c[0:4, :]                  # multiplicative part of box encoding
    Bc = c[4:8, :]                 # additive part of box encoding
    ch = lax.broadcasted_iota(jnp.int32, (4, D), 0)
    ones_lhs = jnp.ones((8, strip), jnp.bfloat16)
    i_base = lax.broadcasted_iota(jnp.int32, (strip, D), 0)
    j_idx = lax.broadcasted_iota(jnp.int32, (strip, D), 1)
    pad_lanes = d_orig != D
    if pad_lanes:
        lane_ok = lax.broadcasted_iota(jnp.int32, (1, D), 1) < d_orig

    acc = f32(0.0)                 # sum of per-sample normalized losses

    for b in range(B):             # static unroll: independent per-sample work
        glabel = glabel_ref[b]                     # (1, D) int32
        mask = glabel > 0
        maskf = mask.astype(f32)
        pos_num = jnp.sum(maskf)                   # scalar

        # ---- localization loss (SmoothL1 of encoded boxes), positives only
        gl = gloc_ref[b]                           # (4, D)
        gt = jnp.where(ch >= 2, jnp.log(gl), gl)   # log only on the wh rows
        diff = ploc_ref[b] - (gt * A + Bc)
        sl1 = jnp.sum(_smooth_l1(diff), axis=0, keepdims=True)     # (1, D)

        # ---- per-anchor cross entropy: -log_softmax(plabel)[glabel]
        logits = plabel_ref[b]                     # (C, D)
        z = logits - jnp.max(logits, axis=0, keepdims=True)
        lse = jnp.log(jnp.sum(jnp.exp(z), axis=0, keepdims=True))  # (1, D)
        cls_idx = lax.broadcasted_iota(jnp.int32, logits.shape, 0)
        picked = jnp.sum(jnp.where(cls_idx == glabel, z, f32(0.0)),
                         axis=0, keepdims=True)                    # (1, D)
        con = lse - picked                                         # (1, D)

        # loc loss + confidence loss on positives
        base = jnp.sum(maskf * (sl1 + con))        # scalar

        # ---- hard negative mining: stable descending rank of con_neg
        con_neg = jnp.where(mask, f32(0.0), con)   # (1, D)
        if pad_lanes:
            # padded lanes must never be selected as hard negatives
            con_neg = jnp.where(lane_ok, con_neg, f32(-1.0))
        neg_num = jnp.minimum(3.0 * pos_num, f32(d_orig))          # scalar

        cnb = jnp.broadcast_to(con_neg, (strip, D))   # hoisted out of the loop

        def strip_body(s, racc):
            i_idx = i_base + s * strip
            # row values cn[i] for this strip via one-hot select (no transpose)
            cni = jnp.sum(jnp.where(i_idx == j_idx, cnb, f32(0.0)),
                          axis=1, keepdims=True)                   # (strip, 1)
            # rank[j] += #{i in strip : cn[i] > cn[j]  or (== and i < j)}
            before = jnp.logical_or(
                cni > cnb, jnp.logical_and(cni == cnb, i_idx < j_idx))
            bf = before.astype(f32).astype(jnp.bfloat16)           # exact 0/1
            return racc + jnp.dot(ones_lhs, bf,
                                  preferred_element_type=f32)      # MXU reduce

        rank8 = jnp.zeros((8, D), f32)
        if n_strips <= 8:                          # small D: static unroll
            for s in range(n_strips):
                rank8 = strip_body(s, rank8)
        else:                                      # real SSD300 sizes
            rank8 = lax.fori_loop(0, n_strips, strip_body, rank8)
        rank = rank8[0:1, :]                       # (1, D)

        negf = (rank < neg_num).astype(f32)        # hard-negative mask
        total_b = base + jnp.sum(con * negf)       # scalar
        num_mask = (pos_num > 0).astype(f32)
        pos_c = jnp.maximum(pos_num, f32(1e-6))
        acc = acc + total_b * num_mask / pos_c

    out_ref[...] = jnp.full(out_ref.shape, acc, dtype=out_ref.dtype)


def ssd_loss(ploc, plabel, gloc, glabel, dboxes, scale_xy, scale_wh):
    N, _, D = ploc.shape
    C = plabel.shape[1]
    f32 = jnp.float32
    scale_xy = float(scale_xy)
    scale_wh = float(scale_wh)

    # lane-dense padding of the anchor dimension (e.g. 8732 -> 8832)
    D_pad = ((D + 127) // 128) * 128

    def pad_last(x, value):
        if D_pad == D:
            return x
        cfg = [(0, 0)] * (x.ndim - 1) + [(0, D_pad - D)]
        return jnp.pad(x, cfg, constant_values=value)

    ploc_p = pad_last(ploc.astype(f32), 0.0)
    plabel_p = pad_last(plabel.astype(f32), 0.0)
    gloc_p = pad_last(gloc.astype(f32), 1.0)          # keep log() finite on pads
    glabel_p = pad_last(glabel.astype(jnp.int32), 0).reshape(N, 1, D_pad)
    db = pad_last(dboxes.astype(f32).reshape(4, D), 1.0)          # (4, D_pad)

    # hoisted default-box constants: encoded target = f(gloc) * A + B
    db_xy, db_wh = db[:2, :], db[2:, :]
    A = jnp.concatenate([scale_xy / db_wh,
                         jnp.full_like(db_wh, scale_wh)], axis=0)  # (4, D_pad)
    Bc = jnp.concatenate([-scale_xy * db_xy / db_wh,
                          -scale_wh * jnp.log(db_wh)], axis=0)     # (4, D_pad)
    consts = jnp.concatenate([A, Bc], axis=0)[None]                # (1, 8, D_pad)

    # several batch elements per grid step (amortize per-step overhead)
    b_tile = next(bt for bt in (8, 4, 2, 1) if N % bt == 0)
    num_tiles = N // b_tile
    strip = min(128, D_pad)

    kernel = functools.partial(_ssd_loss_kernel, d_orig=D, strip=strip)

    per_tile = pl.pallas_call(
        kernel,
        out_shape=jax.ShapeDtypeStruct((num_tiles, 1, 128), jnp.float32),
        grid_spec=pltpu.PrefetchScalarGridSpec(
            num_scalar_prefetch=0,
            grid=(num_tiles,),
            in_specs=[
                pl.BlockSpec((1, 8, D_pad), lambda t: (0, 0, 0)),       # consts
                pl.BlockSpec((b_tile, 4, D_pad), lambda t: (t, 0, 0)),  # ploc
                pl.BlockSpec((b_tile, C, D_pad), lambda t: (t, 0, 0)),  # plabel
                pl.BlockSpec((b_tile, 4, D_pad), lambda t: (t, 0, 0)),  # gloc
                pl.BlockSpec((b_tile, 1, D_pad), lambda t: (t, 0, 0)),  # glabel
            ],
            out_specs=pl.BlockSpec((1, 1, 128), lambda t: (t, 0, 0)),
        ),
        compiler_params=pltpu.CompilerParams(
            dimension_semantics=("parallel",)),
    )(consts, ploc_p, plabel_p, gloc_p, glabel_p)

    # per-tile outputs hold the sum of per-sample normalized losses; .mean(dim=0)
    return jnp.sum(per_tile[:, 0, 0]) / N


def ssd_loss_reference(ploc, plabel, gloc, glabel, dboxes, scale_xy, scale_wh):
    """Pure-JAX reference mirroring the PyTorch module (sanity check)."""
    N, _, D = ploc.shape
    mask = glabel > 0
    pos_num = jnp.sum(mask, axis=1).astype(jnp.float32)

    gxy = scale_xy * (gloc[:, :2, :] - dboxes[:, :2, :]) / dboxes[:, 2:, :]
    gwh = scale_wh * jnp.log(gloc[:, 2:, :] / dboxes[:, 2:, :])
    vec_gd = jnp.concatenate([gxy, gwh], axis=1)

    sl1 = jnp.sum(_smooth_l1(ploc - vec_gd), axis=1)
    sl1 = jnp.sum(mask.astype(jnp.float32) * sl1, axis=1)

    logsm = jax.nn.log_softmax(plabel, axis=1)
    con = -jnp.take_along_axis(logsm, glabel[:, None, :], axis=1)[:, 0, :]

    con_neg = jnp.where(mask, 0.0, con)
    con_idx = jnp.argsort(-con_neg, axis=1, stable=True)
    con_rank = jnp.argsort(con_idx, axis=1, stable=True)
    neg_num = jnp.clip(3 * jnp.sum(mask, axis=1), max=D)[:, None]
    neg_mask = con_rank < neg_num

    closs = jnp.sum(con * (mask.astype(jnp.float32) + neg_mask.astype(jnp.float32)),
                    axis=1)
    total = sl1 + closs
    num_mask = (pos_num > 0).astype(jnp.float32)
    pos_num = jnp.clip(pos_num, min=1e-6)
    return jnp.mean(total * num_mask / pos_num)


if __name__ == "__main__":
    N, C, D = 2, 8, 256          # small shapes: batch=2, 8 classes, 256 default boxes
    key = jax.random.PRNGKey(0)
    k1, k2, k3, k4, k5, k6, k7, k8 = jax.random.split(key, 8)

    ploc = jax.random.normal(k1, (N, 4, D), jnp.float32)
    plabel = jax.random.normal(k2, (N, C, D), jnp.float32)

    # ground-truth boxes in xywh; w/h strictly positive (log is taken on the ratio)
    g_xy = jax.random.uniform(k3, (N, 2, D), jnp.float32, 0.1, 0.9)
    g_wh = jax.random.uniform(k4, (N, 2, D), jnp.float32, 0.05, 0.95)
    gloc = jnp.concatenate([g_xy, g_wh], axis=1)

    # labels: ~25% positives, rest background (0)
    raw_lab = jax.random.randint(k5, (N, D), 1, C)
    keep = jax.random.uniform(k6, (N, D)) < 0.25
    glabel = jnp.where(keep, raw_lab, 0).astype(jnp.int32)

    # deterministic synthetic default boxes ("parameter" of the module)
    d_xy = jax.random.uniform(k7, (2, D), jnp.float32, 0.1, 0.9)
    d_wh = jax.random.uniform(k8, (2, D), jnp.float32, 0.05, 0.5)
    dboxes = jnp.concatenate([d_xy, d_wh], axis=0)[None]        # (1, 4, D)

    scale_xy = 1.0 / 0.1   # typical SSD encoding scales
    scale_wh = 1.0 / 0.2

    out = ssd_loss(ploc, plabel, gloc, glabel, dboxes, scale_xy, scale_wh)
    jax.block_until_ready(out)

    ref = ssd_loss_reference(ploc, plabel, gloc, glabel, dboxes, scale_xy, scale_wh)
    assert jnp.allclose(out, ref, rtol=5e-3, atol=5e-3), (out, ref)

    print("KERNEL_OK")
</pallas_src>

<mosaic_0001>
module attributes {stable_mosaic.version = 11 : i64} {
  func.func @_ssd_loss_kernel(%arg0: i32, %arg1: memref<1x8x256xf32, #tpu.memory_space<vmem>>, %arg2: memref<2x4x256xf32, #tpu.memory_space<vmem>>, %arg3: memref<2x8x256xf32, #tpu.memory_space<vmem>>, %arg4: memref<2x4x256xf32, #tpu.memory_space<vmem>>, %arg5: memref<2x1x256xi32, #tpu.memory_space<vmem>>, %arg6: memref<1x1x128xf32, #tpu.memory_space<vmem>>) attributes {dimension_semantics = [#tpu.dimension_semantics<parallel>], iteration_bounds = array<i64: 1>, scalar_prefetch = 0 : i64, scratch_operands = 0 : i64, tpu.core_type = #tpu.core_type<tc>, window_params = [{pipeline_mode = #tpu.pipeline_mode<synchronous>, transform_indices = @transform_0, window_bounds = array<i64: 1, 8, 256>}, {transform_indices = @transform_1, window_bounds = array<i64: 2, 4, 256>}, {transform_indices = @transform_2, window_bounds = array<i64: 2, 8, 256>}, {transform_indices = @transform_3, window_bounds = array<i64: 2, 4, 256>}, {transform_indices = @transform_4, window_bounds = array<i64: 2, 1, 256>}, {transform_indices = @transform_5, window_bounds = array<i64: 1, 1, 128>}]} {
    %c0 = arith.constant 0 : index
    %c0_0 = arith.constant 0 : index
    %c0_1 = arith.constant 0 : index
    %0 = vector.load %arg1[%c0, %c0_0, %c0_1] : memref<1x8x256xf32, #tpu.memory_space<vmem>>, vector<1x8x256xf32>
    %1 = vector.shape_cast %0 : vector<1x8x256xf32> to vector<8x256xf32>
    %2 = vector.extract_strided_slice %1 {offsets = [0, 0], sizes = [4, 256], strides = [1, 1]} : vector<8x256xf32> to vector<4x256xf32>
    %3 = vector.extract_strided_slice %1 {offsets = [4, 0], sizes = [4, 256], strides = [1, 1]} : vector<8x256xf32> to vector<4x256xf32>
    %4 = tpu.iota {dimensions = array<i32: 0>} : vector<4x256xi32>
    %cst = arith.constant 1.000000e+00 : bf16
    %5 = vector.broadcast %cst : bf16 to vector<8x128xbf16>
    %6 = tpu.iota {dimensions = array<i32: 0>} : vector<128x256xi32>
    %7 = tpu.iota {dimensions = array<i32: 1>} : vector<128x256xi32>
    %c0_2 = arith.constant 0 : index
    %c0_3 = arith.constant 0 : index
    %c0_4 = arith.constant 0 : index
    %8 = vector.load %arg5[%c0_2, %c0_3, %c0_4] : memref<2x1x256xi32, #tpu.memory_space<vmem>>, vector<1x1x256xi32>
    %9 = vector.shape_cast %8 : vector<1x1x256xi32> to vector<1x256xi32>
    %c0_i32 = arith.constant 0 : i32
    %10 = vector.broadcast %c0_i32 : i32 to vector<1x256xi32>
    %11 = arith.cmpi sgt, %9, %10 : vector<1x256xi32>
    %12 = arith.extui %11 : vector<1x256xi1> to vector<1x256xi32>
    %13 = arith.sitofp %12 : vector<1x256xi32> to vector<1x256xf32>
    %14 = vector.shape_cast %13 : vector<1x256xf32> to vector<1x1x256xf32>
    %cst_5 = arith.constant dense<0.000000e+00> : vector<1xf32>
    %15 = vector.multi_reduction <add>, %14, %cst_5 [1, 2] : vector<1x1x256xf32> to vector<1xf32>
    %16 = vector.shape_cast %15 : vector<1xf32> to vector<1x1x1xf32>
    %17 = vector.extract %16[0, 0, 0] : f32 from vector<1x1x1xf32>
    %c0_6 = arith.constant 0 : index
    %c0_7 = arith.constant 0 : index
    %c0_8 = arith.constant 0 : index
    %18 = vector.load %arg4[%c0_6, %c0_7, %c0_8] : memref<2x4x256xf32, #tpu.memory_space<vmem>>, vector<1x4x256xf32>
    %19 = vector.shape_cast %18 : vector<1x4x256xf32> to vector<4x256xf32>
    %c2_i32 = arith.constant 2 : i32
    %20 = vector.broadcast %c2_i32 : i32 to vector<4x256xi32>
    %21 = arith.cmpi sge, %4, %20 : vector<4x256xi32>
    %22 = math.log %19 : vector<4x256xf32>
    %23 = arith.select %21, %22, %19 : vector<4x256xi1>, vector<4x256xf32>
    %c0_9 = arith.constant 0 : index
    %c0_10 = arith.constant 0 : index
    %c0_11 = arith.constant 0 : index
    %24 = vector.load %arg2[%c0_9, %c0_10, %c0_11] : memref<2x4x256xf32, #tpu.memory_space<vmem>>, vector<1x4x256xf32>
    %25 = vector.shape_cast %24 : vector<1x4x256xf32> to vector<4x256xf32>
    %26 = arith.mulf %23, %2 : vector<4x256xf32>
    %27 = arith.addf %26, %3 : vector<4x256xf32>
    %28 = arith.subf %25, %27 : vector<4x256xf32>
    %29 = math.absf %28 : vector<4x256xf32>
    %cst_12 = arith.constant 1.000000e+00 : f32
    %30 = vector.broadcast %cst_12 : f32 to vector<4x256xf32>
    %31 = arith.cmpf olt, %29, %30 : vector<4x256xf32>
    %cst_13 = arith.constant 5.000000e-01 : f32
    %32 = vector.broadcast %cst_13 : f32 to vector<4x256xf32>
    %33 = arith.mulf %32, %28 : vector<4x256xf32>
    %34 = arith.mulf %33, %28 : vector<4x256xf32>
    %cst_14 = arith.constant 5.000000e-01 : f32
    %35 = vector.broadcast %cst_14 : f32 to vector<4x256xf32>
    %36 = arith.subf %29, %35 : vector<4x256xf32>
    %37 = arith.select %31, %34, %36 : vector<4x256xi1>, vector<4x256xf32>
    %cst_15 = arith.constant dense<0.000000e+00> : vector<256xf32>
    %38 = vector.multi_reduction <add>, %37, %cst_15 [0] : vector<4x256xf32> to vector<256xf32>
    %39 = vector.shape_cast %38 : vector<256xf32> to vector<1x256xf32>
    %c0_16 = arith.constant 0 : index
    %c0_17 = arith.constant 0 : index
    %c0_18 = arith.constant 0 : index
    %40 = vector.load %arg3[%c0_16, %c0_17, %c0_18] : memref<2x8x256xf32, #tpu.memory_space<vmem>>, vector<1x8x256xf32>
    %41 = vector.shape_cast %40 : vector<1x8x256xf32> to vector<8x256xf32>
    %cst_19 = arith.constant dense<0xFF800000> : vector<256xf32>
    %42 = vector.multi_reduction <maximumf>, %41, %cst_19 [0] : vector<8x256xf32> to vector<256xf32>
    %43 = vector.shape_cast %42 : vector<256xf32> to vector<1x256xf32>
    %44 = vector.broadcast %43 : vector<1x256xf32> to vector<8x256xf32>
    %45 = arith.subf %41, %44 : vector<8x256xf32>
    %46 = math.exp %45 : vector<8x256xf32>
    %cst_20 = arith.constant dense<0.000000e+00> : vector<256xf32>
    %47 = vector.multi_reduction <add>, %46, %cst_20 [0] : vector<8x256xf32> to vector<256xf32>
    %48 = vector.shape_cast %47 : vector<256xf32> to vector<1x256xf32>
    %49 = math.log %48 : vector<1x256xf32>
    %50 = tpu.iota {dimensions = array<i32: 0>} : vector<8x256xi32>
    %51 = vector.broadcast %9 : vector<1x256xi32> to vector<8x256xi32>
    %52 = arith.cmpi eq, %50, %51 : vector<8x256xi32>
    %cst_21 = arith.constant 0.000000e+00 : f32
    %53 = vector.broadcast %cst_21 : f32 to vector<8x256xf32>
    %54 = arith.select %52, %45, %53 : vector<8x256xi1>, vector<8x256xf32>
    %cst_22 = arith.constant dense<0.000000e+00> : vector<256xf32>
    %55 = vector.multi_reduction <add>, %54, %cst_22 [0] : vector<8x256xf32> to vector<256xf32>
    %56 = vector.shape_cast %55 : vector<256xf32> to vector<1x256xf32>
    %57 = arith.subf %49, %56 : vector<1x256xf32>
    %58 = arith.addf %39, %57 : vector<1x256xf32>
    %59 = arith.mulf %13, %58 : vector<1x256xf32>
    %60 = vector.shape_cast %59 : vector<1x256xf32> to vector<1x1x256xf32>
    %cst_23 = arith.constant dense<0.000000e+00> : vector<1xf32>
    %61 = vector.multi_reduction <add>, %60, %cst_23 [1, 2] : vector<1x1x256xf32> to vector<1xf32>
    %62 = vector.shape_cast %61 : vector<1xf32> to vector<1x1x1xf32>
    %63 = vector.extract %62[0, 0, 0] : f32 from vector<1x1x1xf32>
    %cst_24 = arith.constant 0.000000e+00 : f32
    %64 = vector.broadcast %cst_24 : f32 to vector<1x256xf32>
    %65 = arith.select %11, %64, %57 : vector<1x256xi1>, vector<1x256xf32>
    %cst_25 = arith.constant 3.000000e+00 : f32
    %66 = arith.mulf %cst_25, %17 : f32
    %cst_26 = arith.constant 2.560000e+02 : f32
    %67 = arith.minimumf %66, %cst_26 : f32
    %68 = vector.shape_cast %65 : vector<1x256xf32> to vector<1x256xf32>
    %69 = vector.broadcast %68 : vector<1x256xf32> to vector<128x256xf32>
    %cst_27 = arith.constant 0.000000e+00 : f32
    %70 = vector.broadcast %cst_27 : f32 to vector<8x256xf32>
    %c0_i32_28 = arith.constant 0 : i32
    %71 = vector.broadcast %c0_i32_28 : i32 to vector<128x256xi32>
    %72 = arith.addi %6, %71 : vector<128x256xi32>
    %73 = arith.cmpi eq, %72, %7 : vector<128x256xi32>
    %cst_29 = arith.constant 0.000000e+00 : f32
    %74 = vector.broadcast %cst_29 : f32 to vector<128x256xf32>
    %75 = arith.select %73, %69, %74 : vector<128x256xi1>, vector<128x256xf32>
    %cst_30 = arith.constant dense<0.000000e+00> : vector<128xf32>
    %76 = vector.multi_reduction <add>, %75, %cst_30 [1] : vector<128x256xf32> to vector<128xf32>
    %77 = vector.shape_cast %76 : vector<128xf32> to vector<128x1xf32>
    %78 = vector.broadcast %77 : vector<128x1xf32> to vector<128x256xf32>
    %79 = arith.cmpf ogt, %78, %69 : vector<128x256xf32>
    %80 = vector.broadcast %77 : vector<128x1xf32> to vector<128x256xf32>
    %81 = arith.cmpf oeq, %80, %69 : vector<128x256xf32>
    %82 = arith.cmpi slt, %72, %7 : vector<128x256xi32>
    %83 = arith.andi %81, %82 : vector<128x256xi1>
    %84 = arith.ori %79, %83 : vector<128x256xi1>
    %85 = arith.extui %84 : vector<128x256xi1> to vector<128x256xi32>
    %86 = arith.sitofp %85 : vector<128x256xi32> to vector<128x256xf32>
    %87 = arith.truncf %86 : vector<128x256xf32> to vector<128x256xbf16>
    %cst_31 = arith.constant dense<0.000000e+00> : vector<8x256xf32>
    %88 = tpu.matmul %5, %87, %cst_31 {dimension_numbers = #tpu.dot_dimension_numbers<[1], [0], [0], [1], [0, 0, 1, 1], [], []>} : vector<8x128xbf16>, vector<128x256xbf16>, vector<8x256xf32> -> vector<8x256xf32>
    %89 = arith.addf %70, %88 : vector<8x256xf32>
    %c128_i32 = arith.constant 128 : i32
    %90 = vector.broadcast %c128_i32 : i32 to vector<128x256xi32>
    %91 = arith.addi %6, %90 : vector<128x256xi32>
    %92 = arith.cmpi eq, %91, %7 : vector<128x256xi32>
    %cst_32 = arith.constant 0.000000e+00 : f32
    %93 = vector.broadcast %cst_32 : f32 to vector<128x256xf32>
    %94 = arith.select %92, %69, %93 : vector<128x256xi1>, vector<128x256xf32>
    %cst_33 = arith.constant dense<0.000000e+00> : vector<128xf32>
    %95 = vector.multi_reduction <add>, %94, %cst_33 [1] : vector<128x256xf32> to vector<128xf32>
    %96 = vector.shape_cast %95 : vector<128xf32> to vector<128x1xf32>
    %97 = vector.broadcast %96 : vector<128x1xf32> to vector<128x256xf32>
    %98 = arith.cmpf ogt, %97, %69 : vector<128x256xf32>
    %99 = vector.broadcast %96 : vector<128x1xf32> to vector<128x256xf32>
    %100 = arith.cmpf oeq, %99, %69 : vector<128x256xf32>
    %101 = arith.cmpi slt, %91, %7 : vector<128x256xi32>
    %102 = arith.andi %100, %101 : vector<128x256xi1>
    %103 = arith.ori %98, %102 : vector<128x256xi1>
    %104 = arith.extui %103 : vector<128x256xi1> to vector<128x256xi32>
    %105 = arith.sitofp %104 : vector<128x256xi32> to vector<128x256xf32>
    %106 = arith.truncf %105 : vector<128x256xf32> to vector<128x256xbf16>
    %cst_34 = arith.constant dense<0.000000e+00> : vector<8x256xf32>
    %107 = tpu.matmul %5, %106, %cst_34 {dimension_numbers = #tpu.dot_dimension_numbers<[1], [0], [0], [1], [0, 0, 1, 1], [], []>} : vector<8x128xbf16>, vector<128x256xbf16>, vector<8x256xf32> -> vector<8x256xf32>
    %108 = arith.addf %89, %107 : vector<8x256xf32>
    %109 = vector.extract_strided_slice %108 {offsets = [0, 0], sizes = [1, 256], strides = [1, 1]} : vector<8x256xf32> to vector<1x256xf32>
    %110 = vector.broadcast %67 : f32 to vector<1x256xf32>
    %111 = arith.cmpf olt, %109, %110 : vector<1x256xf32>
    %112 = arith.extui %111 : vector<1x256xi1> to vector<1x256xi32>
    %113 = arith.sitofp %112 : vector<1x256xi32> to vector<1x256xf32>
    %114 = arith.mulf %57, %113 : vector<1x256xf32>
    %115 = vector.shape_cast %114 : vector<1x256xf32> to vector<1x1x256xf32>
    %cst_35 = arith.constant dense<0.000000e+00> : vector<1xf32>
    %116 = vector.multi_reduction <add>, %115, %cst_35 [1, 2] : vector<1x1x256xf32> to vector<1xf32>
    %117 = vector.shape_cast %116 : vector<1xf32> to vector<1x1x1xf32>
    %118 = vector.extract %117[0, 0, 0] : f32 from vector<1x1x1xf32>
    %119 = arith.addf %63, %118 : f32
    %cst_36 = arith.constant 0.000000e+00 : f32
    %120 = arith.cmpf ogt, %17, %cst_36 : f32
    %121 = arith.extui %120 : i1 to i32
    %122 = arith.sitofp %121 : i32 to f32
    %cst_37 = arith.constant 9.99999997E-7 : f32
    %123 = arith.maximumf %17, %cst_37 : f32
    %124 = arith.mulf %119, %122 : f32
    %125 = arith.divf %124, %123 : f32
    %cst_38 = arith.constant 0.000000e+00 : f32
    %126 = arith.addf %cst_38, %125 : f32
    %c1 = arith.constant 1 : index
    %c0_39 = arith.constant 0 : index
    %c0_40 = arith.constant 0 : index
    %127 = vector.load %arg5[%c1, %c0_39, %c0_40] : memref<2x1x256xi32, #tpu.memory_space<vmem>>, vector<1x1x256xi32>
    %128 = vector.shape_cast %127 : vector<1x1x256xi32> to vector<1x256xi32>
    %c0_i32_41 = arith.constant 0 : i32
    %129 = vector.broadcast %c0_i32_41 : i32 to vector<1x256xi32>
    %130 = arith.cmpi sgt, %128, %129 : vector<1x256xi32>
    %131 = arith.extui %130 : vector<1x256xi1> to vector<1x256xi32>
    %132 = arith.sitofp %131 : vector<1x256xi32> to vector<1x256xf32>
    %133 = vector.shape_cast %132 : vector<1x256xf32> to vector<1x1x256xf32>
    %cst_42 = arith.constant dense<0.000000e+00> : vector<1xf32>
    %134 = vector.multi_reduction <add>, %133, %cst_42 [1, 2] : vector<1x1x256xf32> to vector<1xf32>
    %135 = vector.shape_cast %134 : vector<1xf32> to vector<1x1x1xf32>
    %136 = vector.extract %135[0, 0, 0] : f32 from vector<1x1x1xf32>
    %c1_43 = arith.constant 1 : index
    %c0_44 = arith.constant 0 : index
    %c0_45 = arith.constant 0 : index
    %137 = vector.load %arg4[%c1_43, %c0_44, %c0_45] : memref<2x4x256xf32, #tpu.memory_space<vmem>>, vector<1x4x256xf32>
    %138 = vector.shape_cast %137 : vector<1x4x256xf32> to vector<4x256xf32>
    %c2_i32_46 = arith.constant 2 : i32
    %139 = vector.broadcast %c2_i32_46 : i32 to vector<4x256xi32>
    %140 = arith.cmpi sge, %4, %139 : vector<4x256xi32>
    %141 = math.log %138 : vector<4x256xf32>
    %142 = arith.select %140, %141, %138 : vector<4x256xi1>, vector<4x256xf32>
    %c1_47 = arith.constant 1 : index
    %c0_48 = arith.constant 0 : index
    %c0_49 = arith.constant 0 : index
    %143 = vector.load %arg2[%c1_47, %c0_48, %c0_49] : memref<2x4x256xf32, #tpu.memory_space<vmem>>, vector<1x4x256xf32>
    %144 = vector.shape_cast %143 : vector<1x4x256xf32> to vector<4x256xf32>
    %145 = arith.mulf %142, %2 : vector<4x256xf32>
    %146 = arith.addf %145, %3 : vector<4x256xf32>
    %147 = arith.subf %144, %146 : vector<4x256xf32>
    %148 = math.absf %147 : vector<4x256xf32>
    %cst_50 = arith.constant 1.000000e+00 : f32
    %149 = vector.broadcast %cst_50 : f32 to vector<4x256xf32>
    %150 = arith.cmpf olt, %148, %149 : vector<4x256xf32>
    %cst_51 = arith.constant 5.000000e-01 : f32
    %151 = vector.broadcast %cst_51 : f32 to vector<4x256xf32>
    %152 = arith.mulf %151, %147 : vector<4x256xf32>
    %153 = arith.mulf %152, %147 : vector<4x256xf32>
    %cst_52 = arith.constant 5.000000e-01 : f32
    %154 = vector.broadcast %cst_52 : f32 to vector<4x256xf32>
    %155 = arith.subf %148, %154 : vector<4x256xf32>
    %156 = arith.select %150, %153, %155 : vector<4x256xi1>, vector<4x256xf32>
    %cst_53 = arith.constant dense<0.000000e+00> : vector<256xf32>
    %157 = vector.multi_reduction <add>, %156, %cst_53 [0] : vector<4x256xf32> to vector<256xf32>
    %158 = vector.shape_cast %157 : vector<256xf32> to vector<1x256xf32>
    %c1_54 = arith.constant 1 : index
    %c0_55 = arith.constant 0 : index
    %c0_56 = arith.constant 0 : index
    %159 = vector.load %arg3[%c1_54, %c0_55, %c0_56] : memref<2x8x256xf32, #tpu.memory_space<vmem>>, vector<1x8x256xf32>
    %160 = vector.shape_cast %159 : vector<1x8x256xf32> to vector<8x256xf32>
    %cst_57 = arith.constant dense<0xFF800000> : vector<256xf32>
    %161 = vector.multi_reduction <maximumf>, %160, %cst_57 [0] : vector<8x256xf32> to vector<256xf32>
    %162 = vector.shape_cast %161 : vector<256xf32> to vector<1x256xf32>
    %163 = vector.broadcast %162 : vector<1x256xf32> to vector<8x256xf32>
    %164 = arith.subf %160, %163 : vector<8x256xf32>
    %165 = math.exp %164 : vector<8x256xf32>
    %cst_58 = arith.constant dense<0.000000e+00> : vector<256xf32>
    %166 = vector.multi_reduction <add>, %165, %cst_58 [0] : vector<8x256xf32> to vector<256xf32>
    %167 = vector.shape_cast %166 : vector<256xf32> to vector<1x256xf32>
    %168 = math.log %167 : vector<1x256xf32>
    %169 = tpu.iota {dimensions = array<i32: 0>} : vector<8x256xi32>
    %170 = vector.broadcast %128 : vector<1x256xi32> to vector<8x256xi32>
    %171 = arith.cmpi eq, %169, %170 : vector<8x256xi32>
    %cst_59 = arith.constant 0.000000e+00 : f32
    %172 = vector.broadcast %cst_59 : f32 to vector<8x256xf32>
    %173 = arith.select %171, %164, %172 : vector<8x256xi1>, vector<8x256xf32>
    %cst_60 = arith.constant dense<0.000000e+00> : vector<256xf32>
    %174 = vector.multi_reduction <add>, %173, %cst_60 [0] : vector<8x256xf32> to vector<256xf32>
    %175 = vector.shape_cast %174 : vector<256xf32> to vector<1x256xf32>
    %176 = arith.subf %168, %175 : vector<1x256xf32>
    %177 = arith.addf %158, %176 : vector<1x256xf32>
    %178 = arith.mulf %132, %177 : vector<1x256xf32>
    %179 = vector.shape_cast %178 : vector<1x256xf32> to vector<1x1x256xf32>
    %cst_61 = arith.constant dense<0.000000e+00> : vector<1xf32>
    %180 = vector.multi_reduction <add>, %179, %cst_61 [1, 2] : vector<1x1x256xf32> to vector<1xf32>
    %181 = vector.shape_cast %180 : vector<1xf32> to vector<1x1x1xf32>
    %182 = vector.extract %181[0, 0, 0] : f32 from vector<1x1x1xf32>
    %cst_62 = arith.constant 0.000000e+00 : f32
    %183 = vector.broadcast %cst_62 : f32 to vector<1x256xf32>
    %184 = arith.select %130, %183, %176 : vector<1x256xi1>, vector<1x256xf32>
    %cst_63 = arith.constant 3.000000e+00 : f32
    %185 = arith.mulf %cst_63, %136 : f32
    %cst_64 = arith.constant 2.560000e+02 : f32
    %186 = arith.minimumf %185, %cst_64 : f32
    %187 = vector.shape_cast %184 : vector<1x256xf32> to vector<1x256xf32>
    %188 = vector.broadcast %187 : vector<1x256xf32> to vector<128x256xf32>
    %cst_65 = arith.constant 0.000000e+00 : f32
    %189 = vector.broadcast %cst_65 : f32 to vector<8x256xf32>
    %c0_i32_66 = arith.constant 0 : i32
    %190 = vector.broadcast %c0_i32_66 : i32 to vector<128x256xi32>
    %191 = arith.addi %6, %190 : vector<128x256xi32>
    %192 = arith.cmpi eq, %191, %7 : vector<128x256xi32>
    %cst_67 = arith.constant 0.000000e+00 : f32
    %193 = vector.broadcast %cst_67 : f32 to vector<128x256xf32>
    %194 = arith.select %192, %188, %193 : vector<128x256xi1>, vector<128x256xf32>
    %cst_68 = arith.constant dense<0.000000e+00> : vector<128xf32>
    %195 = vector.multi_reduction <add>, %194, %cst_68 [1] : vector<128x256xf32> to vector<128xf32>
    %196 = vector.shape_cast %195 : vector<128xf32> to vector<128x1xf32>
    %197 = vector.broadcast %196 : vector<128x1xf32> to vector<128x256xf32>
    %198 = arith.cmpf ogt, %197, %188 : vector<128x256xf32>
    %199 = vector.broadcast %196 : vector<128x1xf32> to vector<128x256xf32>
    %200 = arith.cmpf oeq, %199, %188 : vector<128x256xf32>
    %201 = arith.cmpi slt, %191, %7 : vector<128x256xi32>
    %202 = arith.andi %200, %201 : vector<128x256xi1>
    %203 = arith.ori %198, %202 : vector<128x256xi1>
    %204 = arith.extui %203 : vector<128x256xi1> to vector<128x256xi32>
    %205 = arith.sitofp %204 : vector<128x256xi32> to vector<128x256xf32>
    %206 = arith.truncf %205 : vector<128x256xf32> to vector<128x256xbf16>
    %cst_69 = arith.constant dense<0.000000e+00> : vector<8x256xf32>
    %207 = tpu.matmul %5, %206, %cst_69 {dimension_numbers = #tpu.dot_dimension_numbers<[1], [0], [0], [1], [0, 0, 1, 1], [], []>} : vector<8x128xbf16>, vector<128x256xbf16>, vector<8x256xf32> -> vector<8x256xf32>
    %208 = arith.addf %189, %207 : vector<8x256xf32>
    %c128_i32_70 = arith.constant 128 : i32
    %209 = vector.broadcast %c128_i32_70 : i32 to vector<128x256xi32>
    %210 = arith.addi %6, %209 : vector<128x256xi32>
    %211 = arith.cmpi eq, %210, %7 : vector<128x256xi32>
    %cst_71 = arith.constant 0.000000e+00 : f32
    %212 = vector.broadcast %cst_71 : f32 to vector<128x256xf32>
    %213 = arith.select %211, %188, %212 : vector<128x256xi1>, vector<128x256xf32>
    %cst_72 = arith.constant dense<0.000000e+00> : vector<128xf32>
    %214 = vector.multi_reduction <add>, %213, %cst_72 [1] : vector<128x256xf32> to vector<128xf32>
    %215 = vector.shape_cast %214 : vector<128xf32> to vector<128x1xf32>
    %216 = vector.broadcast %215 : vector<128x1xf32> to vector<128x256xf32>
    %217 = arith.cmpf ogt, %216, %188 : vector<128x256xf32>
    %218 = vector.broadcast %215 : vector<128x1xf32> to vector<128x256xf32>
    %219 = arith.cmpf oeq, %218, %188 : vector<128x256xf32>
    %220 = arith.cmpi slt, %210, %7 : vector<128x256xi32>
    %221 = arith.andi %219, %220 : vector<128x256xi1>
    %222 = arith.ori %217, %221 : vector<128x256xi1>
    %223 = arith.extui %222 : vector<128x256xi1> to vector<128x256xi32>
    %224 = arith.sitofp %223 : vector<128x256xi32> to vector<128x256xf32>
    %225 = arith.truncf %224 : vector<128x256xf32> to vector<128x256xbf16>
    %cst_73 = arith.constant dense<0.000000e+00> : vector<8x256xf32>
    %226 = tpu.matmul %5, %225, %cst_73 {dimension_numbers = #tpu.dot_dimension_numbers<[1], [0], [0], [1], [0, 0, 1, 1], [], []>} : vector<8x128xbf16>, vector<128x256xbf16>, vector<8x256xf32> -> vector<8x256xf32>
    %227 = arith.addf %208, %226 : vector<8x256xf32>
    %228 = vector.extract_strided_slice %227 {offsets = [0, 0], sizes = [1, 256], strides = [1, 1]} : vector<8x256xf32> to vector<1x256xf32>
    %229 = vector.broadcast %186 : f32 to vector<1x256xf32>
    %230 = arith.cmpf olt, %228, %229 : vector<1x256xf32>
    %231 = arith.extui %230 : vector<1x256xi1> to vector<1x256xi32>
    %232 = arith.sitofp %231 : vector<1x256xi32> to vector<1x256xf32>
    %233 = arith.mulf %176, %232 : vector<1x256xf32>
    %234 = vector.shape_cast %233 : vector<1x256xf32> to vector<1x1x256xf32>
    %cst_74 = arith.constant dense<0.000000e+00> : vector<1xf32>
    %235 = vector.multi_reduction <add>, %234, %cst_74 [1, 2] : vector<1x1x256xf32> to vector<1xf32>
    %236 = vector.shape_cast %235 : vector<1xf32> to vector<1x1x1xf32>
    %237 = vector.extract %236[0, 0, 0] : f32 from vector<1x1x1xf32>
    %238 = arith.addf %182, %237 : f32
    %cst_75 = arith.constant 0.000000e+00 : f32
    %239 = arith.cmpf ogt, %136, %cst_75 : f32
    %240 = arith.extui %239 : i1 to i32
    %241 = arith.sitofp %240 : i32 to f32
    %cst_76 = arith.constant 9.99999997E-7 : f32
    %242 = arith.maximumf %136, %cst_76 : f32
    %243 = arith.mulf %238, %241 : f32
    %244 = arith.divf %243, %242 : f32
    %245 = arith.addf %126, %244 : f32
    %246 = vector.broadcast %245 : f32 to vector<1x1x128xf32>
    %c0_77 = arith.constant 0 : index
    %c0_78 = arith.constant 0 : index
    %c0_79 = arith.constant 0 : index
    %247 = vector.load %arg6[%c0_77, %c0_78, %c0_79] : memref<1x1x128xf32, #tpu.memory_space<vmem>>, vector<1x1x128xf32>
    tpu.vector_store %arg6[%c0_77, %c0_78, %c0_79], %246 {strides = array<i32>} : memref<1x1x128xf32, #tpu.memory_space<vmem>>, vector<1x1x128xf32>,
    return
  }
  func.func @transform_0(%arg0: i32) -> (i32, i32, i32) {
    %c0_i32 = arith.constant 0 : i32
    %c0_i32_0 = arith.constant 0 : i32
    %c0_i32_1 = arith.constant 0 : i32
    %c0_i32_2 = arith.constant 0 : i32
    return %c0_i32, %c0_i32_0, %c0_i32_1 : i32, i32, i32
  }
  func.func @transform_1(%arg0: i32) -> (i32, i32, i32) {
    %c0_i32 = arith.constant 0 : i32
    %c0_i32_0 = arith.constant 0 : i32
    %c0_i32_1 = arith.constant 0 : i32
    return %arg0, %c0_i32, %c0_i32_0 : i32, i32, i32
  }
  func.func @transform_2(%arg0: i32) -> (i32, i32, i32) {
    %c0_i32 = arith.constant 0 : i32
    %c0_i32_0 = arith.constant 0 : i32
    %c0_i32_1 = arith.constant 0 : i32
    return %arg0, %c0_i32, %c0_i32_0 : i32, i32, i32
  }
  func.func @transform_3(%arg0: i32) -> (i32, i32, i32) {
    %c0_i32 = arith.constant 0 : i32
    %c0_i32_0 = arith.constant 0 : i32
    %c0_i32_1 = arith.constant 0 : i32
    return %arg0, %c0_i32, %c0_i32_0 : i32, i32, i32
  }
  func.func @transform_4(%arg0: i32) -> (i32, i32, i32) {
    %c0_i32 = arith.constant 0 : i32
    %c0_i32_0 = arith.constant 0 : i32
    %c0_i32_1 = arith.constant 0 : i32
    return %arg0, %c0_i32, %c0_i32_0 : i32, i32, i32
  }
  func.func @transform_5(%arg0: i32) -> (i32, i32, i32) {
    %c0_i32 = arith.constant 0 : i32
    %c0_i32_0 = arith.constant 0 : i32
    %c0_i32_1 = arith.constant 0 : i32
    return %arg0, %c0_i32, %c0_i32_0 : i32, i32, i32
  }
}

</mosaic_0001>

<llo_original>
// kernel: tpu_custom_call.1
$region0: #{tpu_custom_call.1}
  #allocation0 [shape = 'u32[]', space=smem, size = 0x4, offset = 0x4, fixed_abs, tag = 'smem constant byte address 0x4 - core index']
  #allocation1 [shape = 'u32[144,128]{1,0:T(1,128)}', space=vmem, size = 0x12000, scoped, tag = 'internal scratch']
  %s0 = inlined_call_operand.hbm [shape: f32[1,8,256], index: 0, kind: input, shape index: {}]
  %s1 = inlined_call_operand.hbm [shape: f32[2,4,256], index: 1, kind: input, shape index: {}]
  %s2 = inlined_call_operand.hbm [shape: f32[2,8,256], index: 2, kind: input, shape index: {}]
  %s3 = inlined_call_operand.hbm [shape: f32[2,4,256], index: 3, kind: input, shape index: {}]
  %s4 = inlined_call_operand.vmem [shape: s32[2,1,256], index: 4, kind: input, shape index: {}]
  %s5 = inlined_call_operand.hbm [shape: f32[1,1,128], index: 5, kind: output, shape index: {}]
  %s6 = sld [smem:[#allocation0]]
  $region46: #{tpu_custom_call.1} parent=0
    _
  %s8 = ssub.s32 1, %s6
  %s9 = scalar_select 0, %s8, %s6
  $region1: #{tpu_custom_call.1} parent=0
    #allocation2 [shape = 'u8[8192]{0}', space=vmem, size = 0x2000, scoped, tag = 'input window, operand 0, single buffered']
    #allocation3 [shape = 's32[1]{0}', space=sflag, size = 0x4, scoped, tag = 'scoped memory for tpu_custom_call.1']
    #allocation4 [shape = 's32[1]{0}', space=sflag, size = 0x4, scoped, tag = 'scoped memory for tpu_custom_call.1']
    #allocation5 [shape = 'u8[8192]{0}', space=vmem, size = 0x2000, scoped, tag = 'input window, operand 1, single buffered']
    #allocation6 [shape = 's32[1]{0}', space=sflag, size = 0x4, scoped, tag = 'scoped memory for tpu_custom_call.1']
    #allocation7 [shape = 'u8[16384]{0}', space=vmem, size = 0x4000, scoped, tag = 'input window, operand 2, single buffered']
    #allocation8 [shape = 'u8[8192]{0}', space=vmem, size = 0x2000, scoped, tag = 'input window, operand 3, single buffered']
    #allocation9 [shape = 's32[1]{0}', space=sflag, size = 0x4, scoped, tag = 'scoped memory for tpu_custom_call.1']
    #allocation10 [shape = 'u8[512]{0}', space=vmem, size = 0x400, scoped, tag = 'output window, operand 0, single buffered']
    %10 = vsyncpa [#allocation3], 0
    %11 = vsyncpa [#allocation6], 0
    %12 = vsyncpa [#allocation9], 0
    %13 = vsyncpa [#allocation4], 0
    // Predicated region
    $region2: #{tpu_custom_call.1} parent=1 // pred_check
      _
    $region3: #{tpu_custom_call.1} parent=1 // pred_check_branch
      %15 = sbr.rel (0) target = $region5
    $region4: #{tpu_custom_call.1} parent=1 // pred_region
      %s17 = ssub.s32 256, 256
      %18 = vsyncadd [#allocation3], %s17
      %s20 = sshll.u32 [#allocation2], 4
      %s21 = int_to_ptr.vmem [resolvable:$true] %s20
      %23 = dma.hbm_to_vmem [thread:$0]  %s0, 256, %s21, [#allocation3]
    $region5: #{tpu_custom_call.1} parent=1 // pred_fallthru
      _
    // Predicated region
    $region6: #{tpu_custom_call.1} parent=1 // pred_check
      _
    $region7: #{tpu_custom_call.1} parent=1 // pred_check_branch
      %25 = sbr.rel (0) target = $region9
    $region8: #{tpu_custom_call.1} parent=1 // pred_region
      %s27 = ssub.s32 256, 256
      %28 = vsyncadd [#allocation6], %s27
      %s29 = sshll.u32 [#allocation5], 4
      %s30 = int_to_ptr.vmem [resolvable:$true] %s29
      %35 = dma.hbm_to_vmem [thread:$0]  %s1, 256, %s30, [#allocation6], 128, 128, 8
    $region9: #{tpu_custom_call.1} parent=1 // pred_fallthru
      _
    // Predicated region
    $region10: #{tpu_custom_call.1} parent=1 // pred_check
      _
    $region11: #{tpu_custom_call.1} parent=1 // pred_check_branch
      %37 = sbr.rel (0) target = $region13
    $region12: #{tpu_custom_call.1} parent=1 // pred_region
      %s39 = ssub.s32 512, 512
      %40 = vsyncadd [#allocation6], %s39
      %s41 = sshll.u32 [#allocation7], 4
      %s42 = int_to_ptr.vmem [resolvable:$true] %s41
      %47 = dma.hbm_to_vmem [thread:$0]  %s2, 512, %s42, [#allocation6], 256, 256, 16
    $region13: #{tpu_custom_call.1} parent=1 // pred_fallthru
      _
    // Predicated region
    $region14: #{tpu_custom_call.1} parent=1 // pred_check
      _
    $region15: #{tpu_custom_call.1} parent=1 // pred_check_branch
      %49 = sbr.rel (0) target = $region17
    $region16: #{tpu_custom_call.1} parent=1 // pred_region
      %s51 = ssub.s32 256, 256
      %52 = vsyncadd [#allocation9], %s51
      %s53 = sshll.u32 [#allocation8], 4
      %s54 = int_to_ptr.vmem [resolvable:$true] %s53
      %59 = dma.hbm_to_vmem [thread:$0]  %s3, 256, %s54, [#allocation9], 128, 128, 8
    $region17: #{tpu_custom_call.1} parent=1 // pred_fallthru
      _
    // Predicated region
    $region18: #{tpu_custom_call.1} parent=1 // pred_check
      _
    $region19: #{tpu_custom_call.1} parent=1 // pred_check_branch
      %61 = sbr.rel (0) target = $region21
    $region20: #{tpu_custom_call.1} parent=1 // pred_region
      _
    $region21: #{tpu_custom_call.1} parent=1 // pred_fallthru
      _
    // Predicated region
    $region22: #{tpu_custom_call.1} parent=1 // pred_check
      _
    $region23: #{tpu_custom_call.1} parent=1 // pred_check_branch
      %63 = sbr.rel (0) target = $region25
    $region24: #{tpu_custom_call.1} parent=1 // pred_region
      %64 = dma.done [#allocation3], 256
    $region25: #{tpu_custom_call.1} parent=1 // pred_fallthru
      _
    // Predicated region
    $region26: #{tpu_custom_call.1} parent=1 // pred_check
      _
    $region27: #{tpu_custom_call.1} parent=1 // pred_check_branch
      %66 = sbr.rel (0) target = $region29
    $region28: #{tpu_custom_call.1} parent=1 // pred_region
      %67 = dma.done [#allocation6], 256
    $region29: #{tpu_custom_call.1} parent=1 // pred_fallthru
      _
    // Predicated region
    $region30: #{tpu_custom_call.1} parent=1 // pred_check
      _
    $region31: #{tpu_custom_call.1} parent=1 // pred_check_branch
      %69 = sbr.rel (0) target = $region33
    $region32: #{tpu_custom_call.1} parent=1 // pred_region
      %70 = dma.done [#allocation6], 512
    $region33: #{tpu_custom_call.1} parent=1 // pred_fallthru
      _
    // Predicated region
    $region34: #{tpu_custom_call.1} parent=1 // pred_check
      _
    $region35: #{tpu_custom_call.1} parent=1 // pred_check_branch
      %72 = sbr.rel (0) target = $region37
    $region36: #{tpu_custom_call.1} parent=1 // pred_region
      %73 = dma.done [#allocation9], 256
    $region37: #{tpu_custom_call.1} parent=1 // pred_fallthru
      _
    %v76 = vld [vmem:[#allocation2] sm:$0xff]
    %v77 = vld [vmem:[#allocation2 + $0x8] sm:$0xff]
    %v78 = vlaneseq
    %v79 = vshrl.u32 %v78, 7
    %v80 = vadd.s32 %v79, 8
    %v81 = vadd.s32 %v79, 16
    %v82 = vadd.s32 %v79, 24
    %v83 = vadd.s32 %v79, 32
    %v84 = vadd.s32 %v79, 40
    %v85 = vadd.s32 %v79, 48
    %v86 = vadd.s32 %v79, 56
    %v87 = vadd.s32 %v79, 64
    %v88 = vadd.s32 %v79, 72
    %v89 = vadd.s32 %v79, 80
    %v90 = vadd.s32 %v79, 88
    %v91 = vadd.s32 %v79, 96
    %v92 = vadd.s32 %v79, 104
    %v93 = vadd.s32 %v79, 112
    %v94 = vadd.s32 %v79, 120
    %v95 = vlaneseq
    %v96 = vand.u32 %v95, 127
    %v97 = vadd.s32 %v96, 128
    %v98 = vld [vmem:[%s4] sm:$0x3]
    %vm99 = vcmp.gt.s32.totalorder %v98, 0
    %v100 = vsel %vm99, 1, 0
    %v101 = vcvt.s32.f32 %v100
    %v103 = vlaneseq
    %v104 = vshrl.u32 %v103, 7
    %v105 = vsub.s32 0, %v104
    %v106 = vrot.slane %v101, %v105
    %v107 = vlaneseq
    %v108 = vshrl.u32 %v107, 7
    %v109 = vsub.s32 1, %v108
    %v110 = vrot.slane %v101, %v109
    %vm113 = vcmask 1040384
    %v114 = vsel %vm113, %v106, 0.0
    %v115 = vsel %vm113, %v110, 0.0
    %v116 = vadd.f32 %v114, %v115
    %117 = vadd.xlane.f32.xlu0 %v116
    %v118 = vpop.xlane.xlu0 %117
    %v119 = vrot.slane %v118, 4
    %v120 = vadd.f32 %v118, %v119
    %v121 = vrot.slane %v120, 2
    %v122 = vadd.f32 %v120, %v121
    %v123 = vrot.slane %v122, 1
    %v124 = vadd.f32 %v122, %v123
    %s125 = vtos %v124
    %v126 = vld [vmem:[#allocation8] sm:$0xff]
    %vm127 = vcmp.ge.s32.totalorder %v79, 2
    %v128 = vlog2.pop %v126
    %v129 = vmul.f32 %v128, 0.6931472
    %v131 = vcombine.high %v129, %v129
    %v134 = vcombine.high %v126, %v126
    %v136 = vsel %vm127, %v129, %v126
    %v137 = vsel %vm127, %v131, %v134
    %v138 = vld [vmem:[#allocation5] sm:$0xff]
    %v139 = vmul.f32 %v136, %v76
    %v140 = vmul.f32 %v137, %v77
    %v143 = vrot.slane %v76, 4
    %v144 = vrot.slane %v77, 4
    %v147 = vadd.f32 %v139, %v143
    %v148 = vadd.f32 %v140, %v144
    %v151 = vcombine.low %v147, %v148
    %v153 = vsub.f32 %v138, %v151
    %v154 = vand.u32 2147483647, %v153
    %vm155 = vcmp.lt.f32.partialorder %v154, 1.0
    %v156 = vmul.f32 %v153, 0.5
    %v157 = vmul.f32 %v156, %v153
    %v158 = vsub.f32 %v154, 0.5
    %v159 = vsel %vm155, %v157, %v158
    %v161 = vcombine.high %v159, %v159
    %vm163 = vcmask 1043456
    %v164 = vsel %vm163, %v159, 0.0
    %v165 = vrot.slane %v164, 4
    %v166 = vadd.f32 %v164, %v165
    %v167 = vrot.slane %v166, 2
    %v168 = vadd.f32 %v166, %v167
    %v169 = vrot.slane %v168, 1
    %v170 = vadd.f32 %v168, %v169
    %v171 = vsel %vm163, %v161, 0.0
    %v172 = vrot.slane %v171, 4
    %v173 = vadd.f32 %v171, %v172
    %v174 = vrot.slane %v173, 2
    %v175 = vadd.f32 %v173, %v174
    %v176 = vrot.slane %v175, 1
    %v177 = vadd.f32 %v175, %v176
    %v178 = vld [vmem:[#allocation7] sm:$0xff]
    %v179 = vld [vmem:[#allocation7 + $0x8] sm:$0xff]
    %v180 = vrot.slane %v178, 4
    %v181 = vmax.f32 %v178, %v180
    %v182 = vrot.slane %v181, 2
    %v183 = vmax.f32 %v181, %v182
    %v184 = vrot.slane %v183, 1
    %v185 = vmax.f32 %v183, %v184
    %v186 = vrot.slane %v179, 4
    %v187 = vmax.f32 %v179, %v186
    %v188 = vrot.slane %v187, 2
    %v189 = vmax.f32 %v187, %v188
    %v190 = vrot.slane %v189, 1
    %v191 = vmax.f32 %v189, %v190
    %v192 = vsub.f32 %v178, %v185
    %v193 = vsub.f32 %v179, %v191
    %v194 = vmul.f32 %v192, 1.442695
    %v195 = vpow.pop %v194
    %v196 = vmul.f32 %v193, 1.442695
    %v197 = vpow.pop %v196
    %v198 = vrot.slane %v195, 4
    %v199 = vadd.f32 %v195, %v198
    %v200 = vrot.slane %v199, 2
    %v201 = vadd.f32 %v199, %v200
    %v202 = vrot.slane %v201, 1
    %v203 = vadd.f32 %v201, %v202
    %v204 = vrot.slane %v197, 4
    %v205 = vadd.f32 %v197, %v204
    %v206 = vrot.slane %v205, 2
    %v207 = vadd.f32 %v205, %v206
    %v208 = vrot.slane %v207, 1
    %v209 = vadd.f32 %v207, %v208
    %v210 = vlog2.pop %v203
    %v211 = vmul.f32 %v210, 0.6931472
    %v212 = vlog2.pop %v209
    %v213 = vmul.f32 %v212, 0.6931472
    %v214 = vlaneseq
    %v215 = vshrl.u32 %v214, 7
    %v216 = vsub.s32 0, %v215
    %v217 = vrot.slane %v98, %v216
    %v218 = vlaneseq
    %v219 = vshrl.u32 %v218, 7
    %v220 = vsub.s32 1, %v219
    %v221 = vrot.slane %v98, %v220
    %vm222 = vcmp.eq.s32.totalorder %v79, %v217
    %vm223 = vcmp.eq.s32.totalorder %v79, %v221
    %v224 = vsel %vm222, %v192, 0.0
    %v225 = vsel %vm223, %v193, 0.0
    %v226 = vrot.slane %v224, 4
    %v227 = vadd.f32 %v224, %v226
    %v228 = vrot.slane %v227, 2
    %v229 = vadd.f32 %v227, %v228
    %v230 = vrot.slane %v229, 1
    %v231 = vadd.f32 %v229, %v230
    %v232 = vrot.slane %v225, 4
    %v233 = vadd.f32 %v225, %v232
    %v234 = vrot.slane %v233, 2
    %v235 = vadd.f32 %v233, %v234
    %v236 = vrot.slane %v235, 1
    %v237 = vadd.f32 %v235, %v236
    %v238 = vsub.f32 %v211, %v231
    %v239 = vsub.f32 %v213, %v237
    %v240 = vadd.f32 %v170, %v238
    %v241 = vadd.f32 %v177, %v239
    %v244 = vcombine.low %v240, %v241
    %v246 = vunpack.c.l.s4 1966171168
    %v247 = vunpack.c.0.s8 %v246
    %v248 = vlaneseq
    %v249 = vshrl.u32 %v248, 7
    %v250 = vsub.s32 %v247, %v249
    %v251 = vrot.slane %v244, %v250
    %v253 = vunpack.c.l.s4 1966171168
    %v254 = vunpack.c.0.s8 %v253
    %v255 = vlaneseq
    %v256 = vshrl.u32 %v255, 7
    %v257 = vsub.s32 %v254, %v256
    %v258 = vrot.slane %v251, %v257
    %v260 = vmul.f32 %v101, %v258
    %v262 = vlaneseq
    %v263 = vshrl.u32 %v262, 7
    %v264 = vsub.s32 0, %v263
    %v265 = vrot.slane %v260, %v264
    %v266 = vlaneseq
    %v267 = vshrl.u32 %v266, 7
    %v268 = vsub.s32 1, %v267
    %v269 = vrot.slane %v260, %v268
    %v272 = vsel %vm113, %v265, 0.0
    %v273 = vsel %vm113, %v269, 0.0
    %v274 = vadd.f32 %v272, %v273
    %275 = vadd.xlane.f32.xlu0 %v274
    %v276 = vpop.xlane.xlu0 %275
    %v277 = vrot.slane %v276, 4
    %v278 = vadd.f32 %v276, %v277
    %v279 = vrot.slane %v278, 2
    %v280 = vadd.f32 %v278, %v279
    %v281 = vrot.slane %v280, 1
    %v282 = vadd.f32 %v280, %v281
    %s283 = vtos %v282
    %v286 = vcombine.low %v238, %v239
    %v288 = vunpack.c.l.s4 1966171168
    %v289 = vunpack.c.0.s8 %v288
    %v290 = vlaneseq
    %v291 = vshrl.u32 %v290, 7
    %v292 = vsub.s32 %v289, %v291
    %v293 = vrot.slane %v286, %v292
    %v295 = vunpack.c.l.s4 1966171168
    %v296 = vunpack.c.0.s8 %v295
    %v297 = vlaneseq
    %v298 = vshrl.u32 %v297, 7
    %v299 = vsub.s32 %v296, %v298
    %v300 = vrot.slane %v293, %v299
    %v302 = vsel %vm99, 0.0, %v300
    %s303 = smul.f32 %s125, 3.0
    %s304 = smin.f32 %s303, 256.0
    %v306 = vlaneseq
    %v307 = vshrl.u32 %v306, 7
    %v308 = vsub.s32 0, %v307
    %v309 = vrot.slane %v302, %v308
    %v310 = vlaneseq
    %v311 = vshrl.u32 %v310, 7
    %v312 = vsub.s32 1, %v311
    %v313 = vrot.slane %v302, %v312
    %vm316 = vcmp.eq.s32.totalorder %v79, %v96
    %vm317 = vcmp.eq.s32.totalorder %v79, %v97
    %vm318 = vcmp.eq.s32.totalorder %v80, %v96
    %vm319 = vcmp.eq.s32.totalorder %v80, %v97
    %vm320 = vcmp.eq.s32.totalorder %v81, %v96
    %vm321 = vcmp.eq.s32.totalorder %v81, %v97
    %vm322 = vcmp.eq.s32.totalorder %v82, %v96
    %vm323 = vcmp.eq.s32.totalorder %v82, %v97
    %vm324 = vcmp.eq.s32.totalorder %v83, %v96
    %vm325 = vcmp.eq.s32.totalorder %v83, %v97
    %vm326 = vcmp.eq.s32.totalorder %v84, %v96
    %vm327 = vcmp.eq.s32.totalorder %v84, %v97
    %vm328 = vcmp.eq.s32.totalorder %v85, %v96
    %vm329 = vcmp.eq.s32.totalorder %v85, %v97
    %vm330 = vcmp.eq.s32.totalorder %v86, %v96
    %vm331 = vcmp.eq.s32.totalorder %v86, %v97
    %vm332 = vcmp.eq.s32.totalorder %v87, %v96
    %vm333 = vcmp.eq.s32.totalorder %v87, %v97
    %vm334 = vcmp.eq.s32.totalorder %v88, %v96
    %vm335 = vcmp.eq.s32.totalorder %v88, %v97
    %vm336 = vcmp.eq.s32.totalorder %v89, %v96
    %vm337 = vcmp.eq.s32.totalorder %v89, %v97
    %vm338 = vcmp.eq.s32.totalorder %v90, %v96
    %vm339 = vcmp.eq.s32.totalorder %v90, %v97
    %vm340 = vcmp.eq.s32.totalorder %v91, %v96
    %vm341 = vcmp.eq.s32.totalorder %v91, %v97
    %vm342 = vcmp.eq.s32.totalorder %v92, %v96
    %vm343 = vcmp.eq.s32.totalorder %v92, %v97
    %vm344 = vcmp.eq.s32.totalorder %v93, %v96
    %vm345 = vcmp.eq.s32.totalorder %v93, %v97
    %vm346 = vcmp.eq.s32.totalorder %v94, %v96
    %vm347 = vcmp.eq.s32.totalorder %v94, %v97
    %v348 = vsel %vm316, %v309, 0.0
    %v349 = vsel %vm317, %v313, 0.0
    %v350 = vsel %vm318, %v309, 0.0
    %v351 = vsel %vm319, %v313, 0.0
    %v352 = vsel %vm320, %v309, 0.0
    %v353 = vsel %vm321, %v313, 0.0
    %v354 = vsel %vm322, %v309, 0.0
    %v355 = vsel %vm323, %v313, 0.0
    %v356 = vsel %vm324, %v309, 0.0
    %v357 = vsel %vm325, %v313, 0.0
    %v358 = vsel %vm326, %v309, 0.0
    %v359 = vsel %vm327, %v313, 0.0
    %v360 = vsel %vm328, %v309, 0.0
    %v361 = vsel %vm329, %v313, 0.0
    %v362 = vsel %vm330, %v309, 0.0
    %v363 = vsel %vm331, %v313, 0.0
    %v364 = vsel %vm332, %v309, 0.0
    %v365 = vsel %vm333, %v313, 0.0
    %v366 = vsel %vm334, %v309, 0.0
    %v367 = vsel %vm335, %v313, 0.0
    %v368 = vsel %vm336, %v309, 0.0
    %v369 = vsel %vm337, %v313, 0.0
    %v370 = vsel %vm338, %v309, 0.0
    %v371 = vsel %vm339, %v313, 0.0
    %v372 = vsel %vm340, %v309, 0.0
    %v373 = vsel %vm341, %v313, 0.0
    %v374 = vsel %vm342, %v309, 0.0
    %v375 = vsel %vm343, %v313, 0.0
    %v376 = vsel %vm344, %v309, 0.0
    %v377 = vsel %vm345, %v313, 0.0
    %v378 = vsel %vm346, %v309, 0.0
    %v379 = vsel %vm347, %v313, 0.0
    %v380 = vadd.f32 %v348, %v349
    %381 = vadd.xlane.f32.xlu0 %v380
    %v382 = vpop.xlane.xlu0 %381
    %v383 = vadd.f32 %v350, %v351
    %384 = vadd.xlane.f32.xlu0 %v383
    %v385 = vpop.xlane.xlu0 %384
    %v386 = vadd.f32 %v352, %v353
    %387 = vadd.xlane.f32.xlu0 %v386
    %v388 = vpop.xlane.xlu0 %387
    %v389 = vadd.f32 %v354, %v355
    %390 = vadd.xlane.f32.xlu0 %v389
    %v391 = vpop.xlane.xlu0 %390
    %v392 = vadd.f32 %v356, %v357
    %393 = vadd.xlane.f32.xlu0 %v392
    %v394 = vpop.xlane.xlu0 %393
    %v395 = vadd.f32 %v358, %v359
    %396 = vadd.xlane.f32.xlu0 %v395
    %v397 = vpop.xlane.xlu0 %396
    %v398 = vadd.f32 %v360, %v361
    %399 = vadd.xlane.f32.xlu0 %v398
    %v400 = vpop.xlane.xlu0 %399
    %v401 = vadd.f32 %v362, %v363
    %402 = vadd.xlane.f32.xlu0 %v401
    %v403 = vpop.xlane.xlu0 %402
    %v404 = vadd.f32 %v364, %v365
    %405 = vadd.xlane.f32.xlu0 %v404
    %v406 = vpop.xlane.xlu0 %405
    %v407 = vadd.f32 %v366, %v367
    %408 = vadd.xlane.f32.xlu0 %v407
    %v409 = vpop.xlane.xlu0 %408
    %v410 = vadd.f32 %v368, %v369
    %411 = vadd.xlane.f32.xlu0 %v410
    %v412 = vpop.xlane.xlu0 %411
    %v413 = vadd.f32 %v370, %v371
    %414 = vadd.xlane.f32.xlu0 %v413
    %v415 = vpop.xlane.xlu0 %414
    %v416 = vadd.f32 %v372, %v373
    %417 = vadd.xlane.f32.xlu0 %v416
    %v418 = vpop.xlane.xlu0 %417
    %v419 = vadd.f32 %v374, %v375
    %420 = vadd.xlane.f32.xlu0 %v419
    %v421 = vpop.xlane.xlu0 %420
    %v422 = vadd.f32 %v376, %v377
    %423 = vadd.xlane.f32.xlu0 %v422
    %v424 = vpop.xlane.xlu0 %423
    %v425 = vadd.f32 %v378, %v379
    %426 = vadd.xlane.f32.xlu0 %v425
    %v427 = vpop.xlane.xlu0 %426
    %vm428 = vcmp.gt.f32.partialorder %v382, %v309
    %vm429 = vcmp.gt.f32.partialorder %v382, %v313
    %vm430 = vcmp.gt.f32.partialorder %v385, %v309
    %vm431 = vcmp.gt.f32.partialorder %v385, %v313
    %vm432 = vcmp.gt.f32.partialorder %v388, %v309
    %vm433 = vcmp.gt.f32.partialorder %v388, %v313
    %vm434 = vcmp.gt.f32.partialorder %v391, %v309
    %vm435 = vcmp.gt.f32.partialorder %v391, %v313
    %vm436 = vcmp.gt.f32.partialorder %v394, %v309
    %vm437 = vcmp.gt.f32.partialorder %v394, %v313
    %vm438 = vcmp.gt.f32.partialorder %v397, %v309
    %vm439 = vcmp.gt.f32.partialorder %v397, %v313
    %vm440 = vcmp.gt.f32.partialorder %v400, %v309
    %vm441 = vcmp.gt.f32.partialorder %v400, %v313
    %vm442 = vcmp.gt.f32.partialorder %v403, %v309
    %vm443 = vcmp.gt.f32.partialorder %v403, %v313
    %vm444 = vcmp.gt.f32.partialorder %v406, %v309
    %vm445 = vcmp.gt.f32.partialorder %v406, %v313
    %vm446 = vcmp.gt.f32.partialorder %v409, %v309
    %vm447 = vcmp.gt.f32.partialorder %v409, %v313
    %vm448 = vcmp.gt.f32.partialorder %v412, %v309
    %vm449 = vcmp.gt.f32.partialorder %v412, %v313
    %vm450 = vcmp.gt.f32.partialorder %v415, %v309
    %vm451 = vcmp.gt.f32.partialorder %v415, %v313
    %vm452 = vcmp.gt.f32.partialorder %v418, %v309
    %vm453 = vcmp.gt.f32.partialorder %v418, %v313
    %vm454 = vcmp.gt.f32.partialorder %v421, %v309
    %vm455 = vcmp.gt.f32.partialorder %v421, %v313
    %vm456 = vcmp.gt.f32.partialorder %v424, %v309
    %vm457 = vcmp.gt.f32.partialorder %v424, %v313
    %vm458 = vcmp.gt.f32.partialorder %v427, %v309
    %vm459 = vcmp.gt.f32.partialorder %v427, %v313
    %vm460 = vcmp.eq.f32.partialorder %v382, %v309
    %vm461 = vcmp.eq.f32.partialorder %v382, %v313
    %vm462 = vcmp.eq.f32.partialorder %v385, %v309
    %vm463 = vcmp.eq.f32.partialorder %v385, %v313
    %vm464 = vcmp.eq.f32.partialorder %v388, %v309
    %vm465 = vcmp.eq.f32.partialorder %v388, %v313
    %vm466 = vcmp.eq.f32.partialorder %v391, %v309
    %vm467 = vcmp.eq.f32.partialorder %v391, %v313
    %vm468 = vcmp.eq.f32.partialorder %v394, %v309
    %vm469 = vcmp.eq.f32.partialorder %v394, %v313
    %vm470 = vcmp.eq.f32.partialorder %v397, %v309
    %vm471 = vcmp.eq.f32.partialorder %v397, %v313
    %vm472 = vcmp.eq.f32.partialorder %v400, %v309
    %vm473 = vcmp.eq.f32.partialorder %v400, %v313
    %vm474 = vcmp.eq.f32.partialorder %v403, %v309
    %vm475 = vcmp.eq.f32.partialorder %v403, %v313
    %vm476 = vcmp.eq.f32.partialorder %v406, %v309
    %vm477 = vcmp.eq.f32.partialorder %v406, %v313
    %vm478 = vcmp.eq.f32.partialorder %v409, %v309
    %vm479 = vcmp.eq.f32.partialorder %v409, %v313
    %vm480 = vcmp.eq.f32.partialorder %v412, %v309
    %vm481 = vcmp.eq.f32.partialorder %v412, %v313
    %vm482 = vcmp.eq.f32.partialorder %v415, %v309
    %vm483 = vcmp.eq.f32.partialorder %v415, %v313
    %vm484 = vcmp.eq.f32.partialorder %v418, %v309
    %vm485 = vcmp.eq.f32.partialorder %v418, %v313
    %vm486 = vcmp.eq.f32.partialorder %v421, %v309
    %vm487 = vcmp.eq.f32.partialorder %v421, %v313
    %vm488 = vcmp.eq.f32.partialorder %v424, %v309
    %vm489 = vcmp.eq.f32.partialorder %v424, %v313
    %vm490 = vcmp.eq.f32.partialorder %v427, %v309
    %vm491 = vcmp.eq.f32.partialorder %v427, %v313
    %vm492 = vcmp.lt.s32.totalorder %v79, %v96
    %vm493 = vcmp.lt.s32.totalorder %v79, %v97
    %vm494 = vcmp.lt.s32.totalorder %v80, %v96
    %vm495 = vcmp.lt.s32.totalorder %v80, %v97
    %vm496 = vcmp.lt.s32.totalorder %v81, %v96
    %vm497 = vcmp.lt.s32.totalorder %v81, %v97
    %vm498 = vcmp.lt.s32.totalorder %v82, %v96
    %vm499 = vcmp.lt.s32.totalorder %v82, %v97
    %vm500 = vcmp.lt.s32.totalorder %v83, %v96
    %vm501 = vcmp.lt.s32.totalorder %v83, %v97
    %vm502 = vcmp.lt.s32.totalorder %v84, %v96
    %vm503 = vcmp.lt.s32.totalorder %v84, %v97
    %vm504 = vcmp.lt.s32.totalorder %v85, %v96
    %vm505 = vcmp.lt.s32.totalorder %v85, %v97
    %vm506 = vcmp.lt.s32.totalorder %v86, %v96
    %vm507 = vcmp.lt.s32.totalorder %v86, %v97
    %vm508 = vcmp.lt.s32.totalorder %v87, %v96
    %vm509 = vcmp.lt.s32.totalorder %v87, %v97
    %vm510 = vcmp.lt.s32.totalorder %v88, %v96
    %vm511 = vcmp.lt.s32.totalorder %v88, %v97
    %vm512 = vcmp.lt.s32.totalorder %v89, %v96
    %vm513 = vcmp.lt.s32.totalorder %v89, %v97
    %vm514 = vcmp.lt.s32.totalorder %v90, %v96
    %vm515 = vcmp.lt.s32.totalorder %v90, %v97
    %vm516 = vcmp.lt.s32.totalorder %v91, %v96
    %vm517 = vcmp.lt.s32.totalorder %v91, %v97
    %vm518 = vcmp.lt.s32.totalorder %v92, %v96
    %vm519 = vcmp.lt.s32.totalorder %v92, %v97
    %vm520 = vcmp.lt.s32.totalorder %v93, %v96
    %vm521 = vcmp.lt.s32.totalorder %v93, %v97
    %vm522 = vcmp.lt.s32.totalorder %v94, %v96
    %vm523 = vcmp.lt.s32.totalorder %v94, %v97
    %vm524 = vmand %vm460, %vm492
    %vm525 = vmand %vm461, %vm493
    %vm526 = vmand %vm462, %vm494
    %vm527 = vmand %vm463, %vm495
    %vm528 = vmand %vm464, %vm496
    %vm529 = vmand %vm465, %vm497
    %vm530 = vmand %vm466, %vm498
    %vm531 = vmand %vm467, %vm499
    %vm532 = vmand %vm468, %vm500
    %vm533 = vmand %vm469, %vm501
    %vm534 = vmand %vm470, %vm502
    %vm535 = vmand %vm471, %vm503
    %vm536 = vmand %vm472, %vm504
    %vm537 = vmand %vm473, %vm505
    %vm538 = vmand %vm474, %vm506
    %vm539 = vmand %vm475, %vm507
    %vm540 = vmand %vm476, %vm508
    %vm541 = vmand %vm477, %vm509
    %vm542 = vmand %vm478, %vm510
    %vm543 = vmand %vm479, %vm511
    %vm544 = vmand %vm480, %vm512
    %vm545 = vmand %vm481, %vm513
    %vm546 = vmand %vm482, %vm514
    %vm547 = vmand %vm483, %vm515
    %vm548 = vmand %vm484, %vm516
    %vm549 = vmand %vm485, %vm517
    %vm550 = vmand %vm486, %vm518
    %vm551 = vmand %vm487, %vm519
    %vm552 = vmand %vm488, %vm520
    %vm553 = vmand %vm489, %vm521
    %vm554 = vmand %vm490, %vm522
    %vm555 = vmand %vm491, %vm523
    %vm556 = vmor %vm428, %vm524
    %vm557 = vmor %vm429, %vm525
    %vm558 = vmor %vm430, %vm526
    %vm559 = vmor %vm431, %vm527
    %vm560 = vmor %vm432, %vm528
    %vm561 = vmor %vm433, %vm529
    %vm562 = vmor %vm434, %vm530
    %vm563 = vmor %vm435, %vm531
    %vm564 = vmor %vm436, %vm532
    %vm565 = vmor %vm437, %vm533
    %vm566 = vmor %vm438, %vm534
    %vm567 = vmor %vm439, %vm535
    %vm568 = vmor %vm440, %vm536
    %vm569 = vmor %vm441, %vm537
    %vm570 = vmor %vm442, %vm538
    %vm571 = vmor %vm443, %vm539
    %vm572 = vmor %vm444, %vm540
    %vm573 = vmor %vm445, %vm541
    %vm574 = vmor %vm446, %vm542
    %vm575 = vmor %vm447, %vm543
    %vm576 = vmor %vm448, %vm544
    %vm577 = vmor %vm449, %vm545
    %vm578 = vmor %vm450, %vm546
    %vm579 = vmor %vm451, %vm547
    %vm580 = vmor %vm452, %vm548
    %vm581 = vmor %vm453, %vm549
    %vm582 = vmor %vm454, %vm550
    %vm583 = vmor %vm455, %vm551
    %vm584 = vmor %vm456, %vm552
    %vm585 = vmor %vm457, %vm553
    %vm586 = vmor %vm458, %vm554
    %vm587 = vmor %vm459, %vm555
    %v588 = vsel %vm556, 1, 0
    %v589 = vsel %vm557, 1, 0
    %v590 = vsel %vm558, 1, 0
    %v591 = vsel %vm559, 1, 0
    %v592 = vsel %vm560, 1, 0
    %v593 = vsel %vm561, 1, 0
    %v594 = vsel %vm562, 1, 0
    %v595 = vsel %vm563, 1, 0
    %v596 = vsel %vm564, 1, 0
    %v597 = vsel %vm565, 1, 0
    %v598 = vsel %vm566, 1, 0
    %v599 = vsel %vm567, 1, 0
    %v600 = vsel %vm568, 1, 0
    %v601 = vsel %vm569, 1, 0
    %v602 = vsel %vm570, 1, 0
    %v603 = vsel %vm571, 1, 0
    %v604 = vsel %vm572, 1, 0
    %v605 = vsel %vm573, 1, 0
    %v606 = vsel %vm574, 1, 0
    %v607 = vsel %vm575, 1, 0
    %v608 = vsel %vm576, 1, 0
    %v609 = vsel %vm577, 1, 0
    %v610 = vsel %vm578, 1, 0
    %v611 = vsel %vm579, 1, 0
    %v612 = vsel %vm580, 1, 0
    %v613 = vsel %vm581, 1, 0
    %v614 = vsel %vm582, 1, 0
    %v615 = vsel %vm583, 1, 0
    %v616 = vsel %vm584, 1, 0
    %v617 = vsel %vm585, 1, 0
    %v618 = vsel %vm586, 1, 0
    %v619 = vsel %vm587, 1, 0
    %v620 = vcvt.s32.f32 %v588
    %v621 = vcvt.s32.f32 %v589
    %v622 = vcvt.s32.f32 %v590
    %v623 = vcvt.s32.f32 %v591
    %v624 = vcvt.s32.f32 %v592
    %v625 = vcvt.s32.f32 %v593
    %v626 = vcvt.s32.f32 %v594
    %v627 = vcvt.s32.f32 %v595
    %v628 = vcvt.s32.f32 %v596
    %v629 = vcvt.s32.f32 %v597
    %v630 = vcvt.s32.f32 %v598
    %v631 = vcvt.s32.f32 %v599
    %v632 = vcvt.s32.f32 %v600
    %v633 = vcvt.s32.f32 %v601
    %v634 = vcvt.s32.f32 %v602
    %v635 = vcvt.s32.f32 %v603
    %v636 = vcvt.s32.f32 %v604
    %v637 = vcvt.s32.f32 %v605
    %v638 = vcvt.s32.f32 %v606
    %v639 = vcvt.s32.f32 %v607
    %v640 = vcvt.s32.f32 %v608
    %v641 = vcvt.s32.f32 %v609
    %v642 = vcvt.s32.f32 %v610
    %v643 = vcvt.s32.f32 %v611
    %v644 = vcvt.s32.f32 %v612
    %v645 = vcvt.s32.f32 %v613
    %v646 = vcvt.s32.f32 %v614
    %v647 = vcvt.s32.f32 %v615
    %v648 = vcvt.s32.f32 %v616
    %v649 = vcvt.s32.f32 %v617
    %v650 = vcvt.s32.f32 %v618
    %v651 = vcvt.s32.f32 %v619
    %v652 = vpack.c.bf16 %v622, %v620
    %v653 = vpack.c.bf16 %v623, %v621
    %v654 = vpack.c.bf16 %v626, %v624
    %v655 = vpack.c.bf16 %v627, %v625
    %v656 = vpack.c.bf16 %v630, %v628
    %v657 = vpack.c.bf16 %v631, %v629
    %v658 = vpack.c.bf16 %v634, %v632
    %v659 = vpack.c.bf16 %v635, %v633
    %v660 = vpack.c.bf16 %v638, %v636
    %v661 = vpack.c.bf16 %v639, %v637
    %v662 = vpack.c.bf16 %v642, %v640
    %v663 = vpack.c.bf16 %v643, %v641
    %v664 = vpack.c.bf16 %v646, %v644
    %v665 = vpack.c.bf16 %v647, %v645
    %v666 = vpack.c.bf16 %v650, %v648
    %v667 = vpack.c.bf16 %v651, %v649
    %v668 = vadd.s32 %v79, 128
    %v669 = vadd.s32 %v80, 128
    %v670 = vadd.s32 %v81, 128
    %v671 = vadd.s32 %v82, 128
    %v672 = vadd.s32 %v83, 128
    %v673 = vadd.s32 %v84, 128
    %v674 = vadd.s32 %v85, 128
    %v675 = vadd.s32 %v86, 128
    %v676 = vadd.s32 %v87, 128
    %v677 = vadd.s32 %v88, 128
    %v678 = vadd.s32 %v89, 128
    %v679 = vadd.s32 %v90, 128
    %v680 = vadd.s32 %v91, 128
    %v681 = vadd.s32 %v92, 128
    %v682 = vadd.s32 %v93, 128
    %v683 = vadd.s32 %v94, 128
    %vm684 = vcmp.eq.s32.totalorder %v668, %v96
    %vm685 = vcmp.eq.s32.totalorder %v668, %v97
    %vm686 = vcmp.eq.s32.totalorder %v669, %v96
    %vm687 = vcmp.eq.s32.totalorder %v669, %v97
    %vm688 = vcmp.eq.s32.totalorder %v670, %v96
    %vm689 = vcmp.eq.s32.totalorder %v670, %v97
    %vm690 = vcmp.eq.s32.totalorder %v671, %v96
    %vm691 = vcmp.eq.s32.totalorder %v671, %v97
    %vm692 = vcmp.eq.s32.totalorder %v672, %v96
    %vm693 = vcmp.eq.s32.totalorder %v672, %v97
    %vm694 = vcmp.eq.s32.totalorder %v673, %v96
    %vm695 = vcmp.eq.s32.totalorder %v673, %v97
    %vm696 = vcmp.eq.s32.totalorder %v674, %v96
    %vm697 = vcmp.eq.s32.totalorder %v674, %v97
    %vm698 = vcmp.eq.s32.totalorder %v675, %v96
    %vm699 = vcmp.eq.s32.totalorder %v675, %v97
    %vm700 = vcmp.eq.s32.totalorder %v676, %v96
    %vm701 = vcmp.eq.s32.totalorder %v676, %v97
    %vm702 = vcmp.eq.s32.totalorder %v677, %v96
    %vm703 = vcmp.eq.s32.totalorder %v677, %v97
    %vm704 = vcmp.eq.s32.totalorder %v678, %v96
    %vm705 = vcmp.eq.s32.totalorder %v678, %v97
    %vm706 = vcmp.eq.s32.totalorder %v679, %v96
    %vm707 = vcmp.eq.s32.totalorder %v679, %v97
    %vm708 = vcmp.eq.s32.totalorder %v680, %v96
    %vm709 = vcmp.eq.s32.totalorder %v680, %v97
    %vm710 = vcmp.eq.s32.totalorder %v681, %v96
    %vm711 = vcmp.eq.s32.totalorder %v681, %v97
    %vm712 = vcmp.eq.s32.totalorder %v682, %v96
    %vm713 = vcmp.eq.s32.totalorder %v682, %v97
    %vm714 = vcmp.eq.s32.totalorder %v683, %v96
    %vm715 = vcmp.eq.s32.totalorder %v683, %v97
    %v716 = vsel %vm684, %v309, 0.0
    %v717 = vsel %vm685, %v313, 0.0
    %v718 = vsel %vm686, %v309, 0.0
    %v719 = vsel %vm687, %v313, 0.0
    %v720 = vsel %vm688, %v309, 0.0
    %v721 = vsel %vm689, %v313, 0.0
    %v722 = vsel %vm690, %v309, 0.0
    %v723 = vsel %vm691, %v313, 0.0
    %v724 = vsel %vm692, %v309, 0.0
    %v725 = vsel %vm693, %v313, 0.0
    %v726 = vsel %vm694, %v309, 0.0
    %v727 = vsel %vm695, %v313, 0.0
    %v728 = vsel %vm696, %v309, 0.0
    %v729 = vsel %vm697, %v313, 0.0
    %v730 = vsel %vm698, %v309, 0.0
    %v731 = vsel %vm699, %v313, 0.0
    %v732 = vsel %vm700, %v309, 0.0
    %v733 = vsel %vm701, %v313, 0.0
    %v734 = vsel %vm702, %v309, 0.0
    %v735 = vsel %vm703, %v313, 0.0
    %v736 = vsel %vm704, %v309, 0.0
    %v737 = vsel %vm705, %v313, 0.0
    %v738 = vsel %vm706, %v309, 0.0
    %v739 = vsel %vm707, %v313, 0.0
    %v740 = vsel %vm708, %v309, 0.0
    %v741 = vsel %vm709, %v313, 0.0
    %v742 = vsel %vm710, %v309, 0.0
    %v743 = vsel %vm711, %v313, 0.0
    %v744 = vsel %vm712, %v309, 0.0
    %v745 = vsel %vm713, %v313, 0.0
    %v746 = vsel %vm714, %v309, 0.0
    %v747 = vsel %vm715, %v313, 0.0
    %v748 = vadd.f32 %v716, %v717
    %749 = vadd.xlane.f32.xlu0 %v748
    %v750 = vpop.xlane.xlu0 %749
    %v751 = vadd.f32 %v718, %v719
    %752 = vadd.xlane.f32.xlu0 %v751
    %v753 = vpop.xlane.xlu0 %752
    %v754 = vadd.f32 %v720, %v721
    %755 = vadd.xlane.f32.xlu0 %v754
    %v756 = vpop.xlane.xlu0 %755
    %v757 = vadd.f32 %v722, %v723
    %758 = vadd.xlane.f32.xlu0 %v757
    %v759 = vpop.xlane.xlu0 %758
    %v760 = vadd.f32 %v724, %v725
    %761 = vadd.xlane.f32.xlu0 %v760
    %v762 = vpop.xlane.xlu0 %761
    %v763 = vadd.f32 %v726, %v727
    %764 = vadd.xlane.f32.xlu0 %v763
    %v765 = vpop.xlane.xlu0 %764
    %v766 = vadd.f32 %v728, %v729
    %767 = vadd.xlane.f32.xlu0 %v766
    %v768 = vpop.xlane.xlu0 %767
    %v769 = vadd.f32 %v730, %v731
    %770 = vadd.xlane.f32.xlu0 %v769
    %v771 = vpop.xlane.xlu0 %770
    %v772 = vadd.f32 %v732, %v733
    %773 = vadd.xlane.f32.xlu0 %v772
    %v774 = vpop.xlane.xlu0 %773
    %v775 = vadd.f32 %v734, %v735
    %776 = vadd.xlane.f32.xlu0 %v775
    %v777 = vpop.xlane.xlu0 %776
    %v778 = vadd.f32 %v736, %v737
    %779 = vadd.xlane.f32.xlu0 %v778
    %v780 = vpop.xlane.xlu0 %779
    %v781 = vadd.f32 %v738, %v739
    %782 = vadd.xlane.f32.xlu0 %v781
    %v783 = vpop.xlane.xlu0 %782
    %v784 = vadd.f32 %v740, %v741
    %785 = vadd.xlane.f32.xlu0 %v784
    %v786 = vpop.xlane.xlu0 %785
    %v787 = vadd.f32 %v742, %v743
    %788 = vadd.xlane.f32.xlu0 %v787
    %v789 = vpop.xlane.xlu0 %788
    %v790 = vadd.f32 %v744, %v745
    %791 = vadd.xlane.f32.xlu0 %v790
    %v792 = vpop.xlane.xlu0 %791
    %v793 = vadd.f32 %v746, %v747
    %794 = vadd.xlane.f32.xlu0 %v793
    %v795 = vpop.xlane.xlu0 %794
    %vm796 = vcmp.gt.f32.partialorder %v750, %v309
    %vm797 = vcmp.gt.f32.partialorder %v750, %v313
    %vm798 = vcmp.gt.f32.partialorder %v753, %v309
    %vm799 = vcmp.gt.f32.partialorder %v753, %v313
    %vm800 = vcmp.gt.f32.partialorder %v756, %v309
    %vm801 = vcmp.gt.f32.partialorder %v756, %v313
    %vm802 = vcmp.gt.f32.partialorder %v759, %v309
    %vm803 = vcmp.gt.f32.partialorder %v759, %v313
    %vm804 = vcmp.gt.f32.partialorder %v762, %v309
    %vm805 = vcmp.gt.f32.partialorder %v762, %v313
    %vm806 = vcmp.gt.f32.partialorder %v765, %v309
    %vm807 = vcmp.gt.f32.partialorder %v765, %v313
    %vm808 = vcmp.gt.f32.partialorder %v768, %v309
    %vm809 = vcmp.gt.f32.partialorder %v768, %v313
    %vm810 = vcmp.gt.f32.partialorder %v771, %v309
    %vm811 = vcmp.gt.f32.partialorder %v771, %v313
    %vm812 = vcmp.gt.f32.partialorder %v774, %v309
    %vm813 = vcmp.gt.f32.partialorder %v774, %v313
    %vm814 = vcmp.gt.f32.partialorder %v777, %v309
    %vm815 = vcmp.gt.f32.partialorder %v777, %v313
    %vm816 = vcmp.gt.f32.partialorder %v780, %v309
    %vm817 = vcmp.gt.f32.partialorder %v780, %v313
    %vm818 = vcmp.gt.f32.partialorder %v783, %v309
    %vm819 = vcmp.gt.f32.partialorder %v783, %v313
    %vm820 = vcmp.gt.f32.partialorder %v786, %v309
    %vm821 = vcmp.gt.f32.partialorder %v786, %v313
    %vm822 = vcmp.gt.f32.partialorder %v789, %v309
    %vm823 = vcmp.gt.f32.partialorder %v789, %v313
    %vm824 = vcmp.gt.f32.partialorder %v792, %v309
    %vm825 = vcmp.gt.f32.partialorder %v792, %v313
    %vm826 = vcmp.gt.f32.partialorder %v795, %v309
    %vm827 = vcmp.gt.f32.partialorder %v795, %v313
    %vm828 = vcmp.eq.f32.partialorder %v750, %v309
    %vm829 = vcmp.eq.f32.partialorder %v750, %v313
    %vm830 = vcmp.eq.f32.partialorder %v753, %v309
    %vm831 = vcmp.eq.f32.partialorder %v753, %v313
    %vm832 = vcmp.eq.f32.partialorder %v756, %v309
    %vm833 = vcmp.eq.f32.partialorder %v756, %v313
    %vm834 = vcmp.eq.f32.partialorder %v759, %v309
    %vm835 = vcmp.eq.f32.partialorder %v759, %v313
    %vm836 = vcmp.eq.f32.partialorder %v762, %v309
    %vm837 = vcmp.eq.f32.partialorder %v762, %v313
    %vm838 = vcmp.eq.f32.partialorder %v765, %v309
    %vm839 = vcmp.eq.f32.partialorder %v765, %v313
    %vm840 = vcmp.eq.f32.partialorder %v768, %v309
    %vm841 = vcmp.eq.f32.partialorder %v768, %v313
    %vm842 = vcmp.eq.f32.partialorder %v771, %v309
    %vm843 = vcmp.eq.f32.partialorder %v771, %v313
    %vm844 = vcmp.eq.f32.partialorder %v774, %v309
    %vm845 = vcmp.eq.f32.partialorder %v774, %v313
    %vm846 = vcmp.eq.f32.partialorder %v777, %v309
    %vm847 = vcmp.eq.f32.partialorder %v777, %v313
    %vm848 = vcmp.eq.f32.partialorder %v780, %v309
    %vm849 = vcmp.eq.f32.partialorder %v780, %v313
    %vm850 = vcmp.eq.f32.partialorder %v783, %v309
    %vm851 = vcmp.eq.f32.partialorder %v783, %v313
    %vm852 = vcmp.eq.f32.partialorder %v786, %v309
    %vm853 = vcmp.eq.f32.partialorder %v786, %v313
    %vm854 = vcmp.eq.f32.partialorder %v789, %v309
    %vm855 = vcmp.eq.f32.partialorder %v789, %v313
    %vm856 = vcmp.eq.f32.partialorder %v792, %v309
    %vm857 = vcmp.eq.f32.partialorder %v792, %v313
    %vm858 = vcmp.eq.f32.partialorder %v795, %v309
    %vm859 = vcmp.eq.f32.partialorder %v795, %v313
    %vm860 = vcmp.lt.s32.totalorder %v668, %v96
    %vm861 = vcmp.lt.s32.totalorder %v668, %v97
    %vm862 = vcmp.lt.s32.totalorder %v669, %v96
    %vm863 = vcmp.lt.s32.totalorder %v669, %v97
    %vm864 = vcmp.lt.s32.totalorder %v670, %v96
    %vm865 = vcmp.lt.s32.totalorder %v670, %v97
    %vm866 = vcmp.lt.s32.totalorder %v671, %v96
    %vm867 = vcmp.lt.s32.totalorder %v671, %v97
    %vm868 = vcmp.lt.s32.totalorder %v672, %v96
    %vm869 = vcmp.lt.s32.totalorder %v672, %v97
    %vm870 = vcmp.lt.s32.totalorder %v673, %v96
    %vm871 = vcmp.lt.s32.totalorder %v673, %v97
    %vm872 = vcmp.lt.s32.totalorder %v674, %v96
    %vm873 = vcmp.lt.s32.totalorder %v674, %v97
    %vm874 = vcmp.lt.s32.totalorder %v675, %v96
    %vm875 = vcmp.lt.s32.totalorder %v675, %v97
    %vm876 = vcmp.lt.s32.totalorder %v676, %v96
    %vm877 = vcmp.lt.s32.totalorder %v676, %v97
    %vm878 = vcmp.lt.s32.totalorder %v677, %v96
    %vm879 = vcmp.lt.s32.totalorder %v677, %v97
    %vm880 = vcmp.lt.s32.totalorder %v678, %v96
    %vm881 = vcmp.lt.s32.totalorder %v678, %v97
    %vm882 = vcmp.lt.s32.totalorder %v679, %v96
    %vm883 = vcmp.lt.s32.totalorder %v679, %v97
    %vm884 = vcmp.lt.s32.totalorder %v680, %v96
    %vm885 = vcmp.lt.s32.totalorder %v680, %v97
    %vm886 = vcmp.lt.s32.totalorder %v681, %v96
    %vm887 = vcmp.lt.s32.totalorder %v681, %v97
    %vm888 = vcmp.lt.s32.totalorder %v682, %v96
    %vm889 = vcmp.lt.s32.totalorder %v682, %v97
    %vm890 = vcmp.lt.s32.totalorder %v683, %v96
    %vm891 = vcmp.lt.s32.totalorder %v683, %v97
    %vm892 = vmand %vm828, %vm860
    %vm893 = vmand %vm829, %vm861
    %vm894 = vmand %vm830, %vm862
    %vm895 = vmand %vm831, %vm863
    %vm896 = vmand %vm832, %vm864
    %vm897 = vmand %vm833, %vm865
    %vm898 = vmand %vm834, %vm866
    %vm899 = vmand %vm835, %vm867
    %vm900 = vmand %vm836, %vm868
    %vm901 = vmand %vm837, %vm869
    %vm902 = vmand %vm838, %vm870
    %vm903 = vmand %vm839, %vm871
    %vm904 = vmand %vm840, %vm872
    %vm905 = vmand %vm841, %vm873
    %vm906 = vmand %vm842, %vm874
    %vm907 = vmand %vm843, %vm875
    %vm908 = vmand %vm844, %vm876
    %vm909 = vmand %vm845, %vm877
    %vm910 = vmand %vm846, %vm878
    %vm911 = vmand %vm847, %vm879
    %vm912 = vmand %vm848, %vm880
    %vm913 = vmand %vm849, %vm881
    %vm914 = vmand %vm850, %vm882
    %vm915 = vmand %vm851, %vm883
    %vm916 = vmand %vm852, %vm884
    %vm917 = vmand %vm853, %vm885
    %vm918 = vmand %vm854, %vm886
    %vm919 = vmand %vm855, %vm887
    %vm920 = vmand %vm856, %vm888
    %vm921 = vmand %vm857, %vm889
    %vm922 = vmand %vm858, %vm890
    %vm923 = vmand %vm859, %vm891
    %vm924 = vmor %vm796, %vm892
    %vm925 = vmor %vm797, %vm893
    %vm926 = vmor %vm798, %vm894
    %vm927 = vmor %vm799, %vm895
    %vm928 = vmor %vm800, %vm896
    %vm929 = vmor %vm801, %vm897
    %vm930 = vmor %vm802, %vm898
    %vm931 = vmor %vm803, %vm899
    %vm932 = vmor %vm804, %vm900
    %vm933 = vmor %vm805, %vm901
    %vm934 = vmor %vm806, %vm902
    %vm935 = vmor %vm807, %vm903
    %vm936 = vmor %vm808, %vm904
    %vm937 = vmor %vm809, %vm905
    %vm938 = vmor %vm810, %vm906
    %vm939 = vmor %vm811, %vm907
    %vm940 = vmor %vm812, %vm908
    %vm941 = vmor %vm813, %vm909
    %vm942 = vmor %vm814, %vm910
    %vm943 = vmor %vm815, %vm911
    %vm944 = vmor %vm816, %vm912
    %vm945 = vmor %vm817, %vm913
    %vm946 = vmor %vm818, %vm914
    %vm947 = vmor %vm819, %vm915
    %vm948 = vmor %vm820, %vm916
    %vm949 = vmor %vm821, %vm917
    %vm950 = vmor %vm822, %vm918
    %vm951 = vmor %vm823, %vm919
    %vm952 = vmor %vm824, %vm920
    %vm953 = vmor %vm825, %vm921
    %vm954 = vmor %vm826, %vm922
    %vm955 = vmor %vm827, %vm923
    %v956 = vsel %vm924, 1, 0
    %v957 = vsel %vm925, 1, 0
    %v958 = vsel %vm926, 1, 0
    %v959 = vsel %vm927, 1, 0
    %v960 = vsel %vm928, 1, 0
    %v961 = vsel %vm929, 1, 0
    %v962 = vsel %vm930, 1, 0
    %v963 = vsel %vm931, 1, 0
    %v964 = vsel %vm932, 1, 0
    %v965 = vsel %vm933, 1, 0
    %v966 = vsel %vm934, 1, 0
    %v967 = vsel %vm935, 1, 0
    %v968 = vsel %vm936, 1, 0
    %v969 = vsel %vm937, 1, 0
    %v970 = vsel %vm938, 1, 0
    %v971 = vsel %vm939, 1, 0
    %v972 = vsel %vm940, 1, 0
    %v973 = vsel %vm941, 1, 0
    %v974 = vsel %vm942, 1, 0
    %v975 = vsel %vm943, 1, 0
    %v976 = vsel %vm944, 1, 0
    %v977 = vsel %vm945, 1, 0
    %v978 = vsel %vm946, 1, 0
    %v979 = vsel %vm947, 1, 0
    %v980 = vsel %vm948, 1, 0
    %v981 = vsel %vm949, 1, 0
    %v982 = vsel %vm950, 1, 0
    %v983 = vsel %vm951, 1, 0
    %v984 = vsel %vm952, 1, 0
    %v985 = vsel %vm953, 1, 0
    %v986 = vsel %vm954, 1, 0
    %v987 = vsel %vm955, 1, 0
    %v988 = vcvt.s32.f32 %v956
    %v989 = vcvt.s32.f32 %v957
    %v990 = vcvt.s32.f32 %v958
    %v991 = vcvt.s32.f32 %v959
    %v992 = vcvt.s32.f32 %v960
    %v993 = vcvt.s32.f32 %v961
    %v994 = vcvt.s32.f32 %v962
    %v995 = vcvt.s32.f32 %v963
    %v996 = vcvt.s32.f32 %v964
    %v997 = vcvt.s32.f32 %v965
    %v998 = vcvt.s32.f32 %v966
    %v999 = vcvt.s32.f32 %v967
    %v1000 = vcvt.s32.f32 %v968
    %v1001 = vcvt.s32.f32 %v969
    %v1002 = vcvt.s32.f32 %v970
    %v1003 = vcvt.s32.f32 %v971
    %v1004 = vcvt.s32.f32 %v972
    %v1005 = vcvt.s32.f32 %v973
    %v1006 = vcvt.s32.f32 %v974
    %v1007 = vcvt.s32.f32 %v975
    %v1008 = vcvt.s32.f32 %v976
    %v1009 = vcvt.s32.f32 %v977
    %v1010 = vcvt.s32.f32 %v978
    %v1011 = vcvt.s32.f32 %v979
    %v1012 = vcvt.s32.f32 %v980
    %v1013 = vcvt.s32.f32 %v981
    %v1014 = vcvt.s32.f32 %v982
    %v1015 = vcvt.s32.f32 %v983
    %v1016 = vcvt.s32.f32 %v984
    %v1017 = vcvt.s32.f32 %v985
    %v1018 = vcvt.s32.f32 %v986
    %v1019 = vcvt.s32.f32 %v987
    %v1020 = vpack.c.bf16 %v990, %v988
    %v1021 = vpack.c.bf16 %v991, %v989
    %v1022 = vpack.c.bf16 %v994, %v992
    %v1023 = vpack.c.bf16 %v995, %v993
    %v1024 = vpack.c.bf16 %v998, %v996
    %v1025 = vpack.c.bf16 %v999, %v997
    %v1026 = vpack.c.bf16 %v1002, %v1000
    %v1027 = vpack.c.bf16 %v1003, %v1001
    %v1028 = vpack.c.bf16 %v1006, %v1004
    %v1029 = vpack.c.bf16 %v1007, %v1005
    %v1030 = vpack.c.bf16 %v1010, %v1008
    %v1031 = vpack.c.bf16 %v1011, %v1009
    %v1032 = vpack.c.bf16 %v1014, %v1012
    %v1033 = vpack.c.bf16 %v1015, %v1013
    %v1034 = vpack.c.bf16 %v1018, %v1016
    %v1035 = vpack.c.bf16 %v1019, %v1017
    %1036 = vmatprep.subr.bf16.mxu0 %v1021
    %1037 = vmatpush1.bf16.msra.mxu0 %v1020
    %1038 = vmatprep.subr.bf16.mxu0 %v1023
    %1039 = vmatpush1.bf16.msra.mxu0 %v1022
    %1040 = vmatprep.subr.bf16.mxu0 %v1025
    %1041 = vmatpush1.bf16.msra.mxu0 %v1024
    %1042 = vmatprep.subr.bf16.mxu0 %v1027
    %1043 = vmatpush1.bf16.msra.mxu0 %v1026
    %1044 = vmatprep.subr.bf16.mxu0 %v1029
    %1045 = vmatpush1.bf16.msra.mxu0 %v1028
    %1046 = vmatprep.subr.bf16.mxu0 %v1031
    %1047 = vmatpush1.bf16.msra.mxu0 %v1030
    %1048 = vmatprep.subr.bf16.mxu0 %v1033
    %1049 = vmatpush1.bf16.msra.mxu0 %v1032
    %1050 = vmatprep.subr.bf16.mxu0 %v1035
    %1051 = vmatpush1.bf16.msra.mxu0 %v1034
    %1052 = vmatprep.subr.bf16.mxu0 0
    %1053 = vmatpush1.bf16.msra.mxu0 0
    %1054 = vmatprep.subr.bf16.mxu0 0
    %1055 = vmatpush1.bf16.msra.mxu0 0
    %1056 = vmatprep.subr.bf16.mxu0 0
    %1057 = vmatpush1.bf16.msra.mxu0 0
    %1058 = vmatprep.subr.bf16.mxu0 0
    %1059 = vmatpush1.bf16.msra.mxu0 0
    %1060 = vmatprep.subr.bf16.mxu0 0
    %1061 = vmatpush1.bf16.msra.mxu0 0
    %1062 = vmatprep.subr.bf16.mxu0 0
    %1063 = vmatpush1.bf16.msra.mxu0 0
    %1064 = vmatprep.subr.bf16.mxu0 0
    %1065 = vmatpush1.bf16.msra.mxu0 0
    %1066 = vmatprep.subr.bf16.mxu0 0
    %1067 = vmatpush1.bf16.msra.mxu0 0
    %1068 = vmatprep.mubr.bf16.mxu0 0
    %1069 = vmatmul.mubr.bf16.gmra.mrb[0].mxu0 1065369472
    %v1070 = vpop.f32.mrb[0].mxu0
    %v1071 = vadd.f32 0.0, %v1070
    %v1072 = vpop.f32.mrb[0].mxu0
    %v1073 = vadd.f32 0.0, %v1072
    %v1074 = vpop.f32.mrb[0].mxu0
    %v1075 = vpop.f32.mrb[0].mxu0
    %1076 = vdwg.mxu0
    %1077 = vmatprep.subr.bf16.mxu0 %v653
    %1078 = vmatpush1.bf16.msra.mxu0 %v652
    %1079 = vmatprep.subr.bf16.mxu0 %v655
    %1080 = vmatpush1.bf16.msra.mxu0 %v654
    %1081 = vmatprep.subr.bf16.mxu0 %v657
    %1082 = vmatpush1.bf16.msra.mxu0 %v656
    %1083 = vmatprep.subr.bf16.mxu0 %v659
    %1084 = vmatpush1.bf16.msra.mxu0 %v658
    %1085 = vmatprep.subr.bf16.mxu0 %v661
    %1086 = vmatpush1.bf16.msra.mxu0 %v660
    %1087 = vmatprep.subr.bf16.mxu0 %v663
    %1088 = vmatpush1.bf16.msra.mxu0 %v662
    %1089 = vmatprep.subr.bf16.mxu0 %v665
    %1090 = vmatpush1.bf16.msra.mxu0 %v664
    %1091 = vmatprep.subr.bf16.mxu0 %v667
    %1092 = vmatpush1.bf16.msra.mxu0 %v666
    %1093 = vmatprep.subr.bf16.mxu0 0
    %1094 = vmatpush1.bf16.msra.mxu0 0
    %1095 = vmatprep.subr.bf16.mxu0 0
    %1096 = vmatpush1.bf16.msra.mxu0 0
    %1097 = vmatprep.subr.bf16.mxu0 0
    %1098 = vmatpush1.bf16.msra.mxu0 0
    %1099 = vmatprep.subr.bf16.mxu0 0
    %1100 = vmatpush1.bf16.msra.mxu0 0
    %1101 = vmatprep.subr.bf16.mxu0 0
    %1102 = vmatpush1.bf16.msra.mxu0 0
    %1103 = vmatprep.subr.bf16.mxu0 0
    %1104 = vmatpush1.bf16.msra.mxu0 0
    %1105 = vmatprep.subr.bf16.mxu0 0
    %1106 = vmatpush1.bf16.msra.mxu0 0
    %1107 = vmatprep.subr.bf16.mxu0 0
    %1108 = vmatpush1.bf16.msra.mxu0 0
    %1109 = vmatprep.mubr.bf16.mxu0 0
    %1110 = vmatmul.mubr.bf16.gmra.mrb[0].mxu0 1065369472
    %v1111 = vpop.f32.mrb[0].mxu0
    %v1112 = vadd.f32 %v1071, %v1111
    %v1113 = vpop.f32.mrb[0].mxu0
    %v1114 = vadd.f32 %v1073, %v1113
    %v1115 = vpop.f32.mrb[0].mxu0
    %v1116 = vpop.f32.mrb[0].mxu0
    %1117 = vdwg.mxu0
    %v1118 = vstv %s304
    %vm1119 = vcmp.lt.f32.partialorder %v1112, %v1118
    %vm1120 = vcmp.lt.f32.partialorder %v1114, %v1118
    %v1121 = vsel %vm1119, 1, 0
    %v1122 = vsel %vm1120, 1, 0
    %v1123 = vcvt.s32.f32 %v1121
    %v1124 = vcvt.s32.f32 %v1122
    %v1125 = vmul.f32 %v238, %v1123
    %v1126 = vmul.f32 %v239, %v1124
    %v1127 = vsel %vm113, %v1125, 0.0
    %v1128 = vsel %vm113, %v1126, 0.0
    %v1129 = vadd.f32 %v1127, %v1128
    %1130 = vadd.xlane.f32.xlu0 %v1129
    %v1131 = vpop.xlane.xlu0 %1130
    %v1132 = vrot.slane %v1131, 4
    %v1133 = vadd.f32 %v1131, %v1132
    %v1134 = vrot.slane %v1133, 2
    %v1135 = vadd.f32 %v1133, %v1134
    %v1136 = vrot.slane %v1135, 1
    %v1137 = vadd.f32 %v1135, %v1136
    %s1138 = vtos %v1137
    %s1139 = sadd.f32 %s283, %s1138
    %p1140 = scmp.gt.f32.partialorder %s125, 0.0
    %s1141 = scalar_select %p1140, 1, 0
    %s1142 = scvt.s32.f32 %s1141
    %s1143 = smax.f32 %s125, 1e-06
    %s1144 = smul.f32 %s1139, %s1142
    %v1145 = vstv %s1143
    %v1146 = vrcp.pop %v1145
    %s1147 = vtos %v1146
    %s1148 = smul.f32 %s1144, %s1147
    %s1149 = sadd.f32 %s1148, 0.0
    %s1150 = scalar_lea.vmem %s4, 2
    %v1151 = vld [vmem:[%s1150] sm:$0x3]
    %vm1152 = vcmp.gt.s32.totalorder %v1151, 0
    %v1153 = vsel %vm1152, 1, 0
    %v1154 = vcvt.s32.f32 %v1153
    %v1156 = vlaneseq
    %v1157 = vshrl.u32 %v1156, 7
    %v1158 = vsub.s32 0, %v1157
    %v1159 = vrot.slane %v1154, %v1158
    %v1160 = vlaneseq
    %v1161 = vshrl.u32 %v1160, 7
    %v1162 = vsub.s32 1, %v1161
    %v1163 = vrot.slane %v1154, %v1162
    %v1166 = vsel %vm113, %v1159, 0.0
    %v1167 = vsel %vm113, %v1163, 0.0
    %v1168 = vadd.f32 %v1166, %v1167
    %1169 = vadd.xlane.f32.xlu0 %v1168
    %v1170 = vpop.xlane.xlu0 %1169
    %v1171 = vrot.slane %v1170, 4
    %v1172 = vadd.f32 %v1170, %v1171
    %v1173 = vrot.slane %v1172, 2
    %v1174 = vadd.f32 %v1172, %v1173
    %v1175 = vrot.slane %v1174, 1
    %v1176 = vadd.f32 %v1174, %v1175
    %s1177 = vtos %v1176
    %s1178 = scalar_lea.vmem [#allocation8], 8
    %v1179 = vld [vmem:[%s1178] sm:$0xff]
    %v1180 = vlog2.pop %v1179
    %v1181 = vmul.f32 %v1180, 0.6931472
    %v1183 = vcombine.high %v1181, %v1181
    %v1186 = vcombine.high %v1179, %v1179
    %v1188 = vsel %vm127, %v1181, %v1179
    %v1189 = vsel %vm127, %v1183, %v1186
    %s1190 = scalar_lea.vmem [#allocation5], 8
    %v1191 = vld [vmem:[%s1190] sm:$0xff]
    %v1192 = vmul.f32 %v1188, %v76
    %v1193 = vmul.f32 %v1189, %v77
    %v1194 = vadd.f32 %v1192, %v143
    %v1195 = vadd.f32 %v1193, %v144
    %v1198 = vcombine.low %v1194, %v1195
    %v1200 = vsub.f32 %v1191, %v1198
    %v1201 = vand.u32 2147483647, %v1200
    %vm1202 = vcmp.lt.f32.partialorder %v1201, 1.0
    %v1203 = vmul.f32 %v1200, 0.5
    %v1204 = vmul.f32 %v1203, %v1200
    %v1205 = vsub.f32 %v1201, 0.5
    %v1206 = vsel %vm1202, %v1204, %v1205
    %v1208 = vcombine.high %v1206, %v1206
    %v1210 = vsel %vm163, %v1206, 0.0
    %v1211 = vrot.slane %v1210, 4
    %v1212 = vadd.f32 %v1210, %v1211
    %v1213 = vrot.slane %v1212, 2
    %v1214 = vadd.f32 %v1212, %v1213
    %v1215 = vrot.slane %v1214, 1
    %v1216 = vadd.f32 %v1214, %v1215
    %v1217 = vsel %vm163, %v1208, 0.0
    %v1218 = vrot.slane %v1217, 4
    %v1219 = vadd.f32 %v1217, %v1218
    %v1220 = vrot.slane %v1219, 2
    %v1221 = vadd.f32 %v1219, %v1220
    %v1222 = vrot.slane %v1221, 1
    %v1223 = vadd.f32 %v1221, %v1222
    %s1224 = scalar_lea.vmem [#allocation7], 16
    %v1225 = vld [vmem:[%s1224] sm:$0xff]
    %v1226 = vld [vmem:[%s1224 + $0x8] sm:$0xff]
    %v1227 = vrot.slane %v1225, 4
    %v1228 = vmax.f32 %v1225, %v1227
    %v1229 = vrot.slane %v1228, 2
    %v1230 = vmax.f32 %v1228, %v1229
    %v1231 = vrot.slane %v1230, 1
    %v1232 = vmax.f32 %v1230, %v1231
    %v1233 = vrot.slane %v1226, 4
    %v1234 = vmax.f32 %v1226, %v1233
    %v1235 = vrot.slane %v1234, 2
    %v1236 = vmax.f32 %v1234, %v1235
    %v1237 = vrot.slane %v1236, 1
    %v1238 = vmax.f32 %v1236, %v1237
    %v1239 = vsub.f32 %v1225, %v1232
    %v1240 = vsub.f32 %v1226, %v1238
    %v1241 = vmul.f32 %v1239, 1.442695
    %v1242 = vpow.pop %v1241
    %v1243 = vmul.f32 %v1240, 1.442695
    %v1244 = vpow.pop %v1243
    %v1245 = vrot.slane %v1242, 4
    %v1246 = vadd.f32 %v1242, %v1245
    %v1247 = vrot.slane %v1246, 2
    %v1248 = vadd.f32 %v1246, %v1247
    %v1249 = vrot.slane %v1248, 1
    %v1250 = vadd.f32 %v1248, %v1249
    %v1251 = vrot.slane %v1244, 4
    %v1252 = vadd.f32 %v1244, %v1251
    %v1253 = vrot.slane %v1252, 2
    %v1254 = vadd.f32 %v1252, %v1253
    %v1255 = vrot.slane %v1254, 1
    %v1256 = vadd.f32 %v1254, %v1255
    %v1257 = vlog2.pop %v1250
    %v1258 = vmul.f32 %v1257, 0.6931472
    %v1259 = vlog2.pop %v1256
    %v1260 = vmul.f32 %v1259, 0.6931472
    %v1261 = vlaneseq
    %v1262 = vshrl.u32 %v1261, 7
    %v1263 = vsub.s32 0, %v1262
    %v1264 = vrot.slane %v1151, %v1263
    %v1265 = vlaneseq
    %v1266 = vshrl.u32 %v1265, 7
    %v1267 = vsub.s32 1, %v1266
    %v1268 = vrot.slane %v1151, %v1267
    %vm1269 = vcmp.eq.s32.totalorder %v79, %v1264
    %vm1270 = vcmp.eq.s32.totalorder %v79, %v1268
    %v1271 = vsel %vm1269, %v1239, 0.0
    %v1272 = vsel %vm1270, %v1240, 0.0
    %v1273 = vrot.slane %v1271, 4
    %v1274 = vadd.f32 %v1271, %v1273
    %v1275 = vrot.slane %v1274, 2
    %v1276 = vadd.f32 %v1274, %v1275
    %v1277 = vrot.slane %v1276, 1
    %v1278 = vadd.f32 %v1276, %v1277
    %v1279 = vrot.slane %v1272, 4
    %v1280 = vadd.f32 %v1272, %v1279
    %v1281 = vrot.slane %v1280, 2
    %v1282 = vadd.f32 %v1280, %v1281
    %v1283 = vrot.slane %v1282, 1
    %v1284 = vadd.f32 %v1282, %v1283
    %v1285 = vsub.f32 %v1258, %v1278
    %v1286 = vsub.f32 %v1260, %v1284
    %v1287 = vadd.f32 %v1216, %v1285
    %v1288 = vadd.f32 %v1223, %v1286
    %v1291 = vcombine.low %v1287, %v1288
    %v1293 = vunpack.c.l.s4 1966171168
    %v1294 = vunpack.c.0.s8 %v1293
    %v1295 = vlaneseq
    %v1296 = vshrl.u32 %v1295, 7
    %v1297 = vsub.s32 %v1294, %v1296
    %v1298 = vrot.slane %v1291, %v1297
    %v1300 = vunpack.c.l.s4 1966171168
    %v1301 = vunpack.c.0.s8 %v1300
    %v1302 = vlaneseq
    %v1303 = vshrl.u32 %v1302, 7
    %v1304 = vsub.s32 %v1301, %v1303
    %v1305 = vrot.slane %v1298, %v1304
    %v1307 = vmul.f32 %v1154, %v1305
    %v1309 = vlaneseq
    %v1310 = vshrl.u32 %v1309, 7
    %v1311 = vsub.s32 0, %v1310
    %v1312 = vrot.slane %v1307, %v1311
    %v1313 = vlaneseq
    %v1314 = vshrl.u32 %v1313, 7
    %v1315 = vsub.s32 1, %v1314
    %v1316 = vrot.slane %v1307, %v1315
    %v1319 = vsel %vm113, %v1312, 0.0
    %v1320 = vsel %vm113, %v1316, 0.0
    %v1321 = vadd.f32 %v1319, %v1320
    %1322 = vadd.xlane.f32.xlu0 %v1321
    %v1323 = vpop.xlane.xlu0 %1322
    %v1324 = vrot.slane %v1323, 4
    %v1325 = vadd.f32 %v1323, %v1324
    %v1326 = vrot.slane %v1325, 2
    %v1327 = vadd.f32 %v1325, %v1326
    %v1328 = vrot.slane %v1327, 1
    %v1329 = vadd.f32 %v1327, %v1328
    %s1330 = vtos %v1329
    %v1333 = vcombine.low %v1285, %v1286
    %v1335 = vunpack.c.l.s4 1966171168
    %v1336 = vunpack.c.0.s8 %v1335
    %v1337 = vlaneseq
    %v1338 = vshrl.u32 %v1337, 7
    %v1339 = vsub.s32 %v1336, %v1338
    %v1340 = vrot.slane %v1333, %v1339
    %v1342 = vunpack.c.l.s4 1966171168
    %v1343 = vunpack.c.0.s8 %v1342
    %v1344 = vlaneseq
    %v1345 = vshrl.u32 %v1344, 7
    %v1346 = vsub.s32 %v1343, %v1345
    %v1347 = vrot.slane %v1340, %v1346
    %v1349 = vsel %vm1152, 0.0, %v1347
    %s1350 = smul.f32 %s1177, 3.0
    %s1351 = smin.f32 %s1350, 256.0
    %v1353 = vlaneseq
    %v1354 = vshrl.u32 %v1353, 7
    %v1355 = vsub.s32 0, %v1354
    %v1356 = vrot.slane %v1349, %v1355
    %v1357 = vlaneseq
    %v1358 = vshrl.u32 %v1357, 7
    %v1359 = vsub.s32 1, %v1358
    %v1360 = vrot.slane %v1349, %v1359
    %v1363 = vsel %vm316, %v1356, 0.0
    %v1364 = vsel %vm317, %v1360, 0.0
    %v1365 = vsel %vm318, %v1356, 0.0
    %v1366 = vsel %vm319, %v1360, 0.0
    %v1367 = vsel %vm320, %v1356, 0.0
    %v1368 = vsel %vm321, %v1360, 0.0
    %v1369 = vsel %vm322, %v1356, 0.0
    %v1370 = vsel %vm323, %v1360, 0.0
    %v1371 = vsel %vm324, %v1356, 0.0
    %v1372 = vsel %vm325, %v1360, 0.0
    %v1373 = vsel %vm326, %v1356, 0.0
    %v1374 = vsel %vm327, %v1360, 0.0
    %v1375 = vsel %vm328, %v1356, 0.0
    %v1376 = vsel %vm329, %v1360, 0.0
    %v1377 = vsel %vm330, %v1356, 0.0
    %v1378 = vsel %vm331, %v1360, 0.0
    %v1379 = vsel %vm332, %v1356, 0.0
    %v1380 = vsel %vm333, %v1360, 0.0
    %v1381 = vsel %vm334, %v1356, 0.0
    %v1382 = vsel %vm335, %v1360, 0.0
    %v1383 = vsel %vm336, %v1356, 0.0
    %v1384 = vsel %vm337, %v1360, 0.0
    %v1385 = vsel %vm338, %v1356, 0.0
    %v1386 = vsel %vm339, %v1360, 0.0
    %v1387 = vsel %vm340, %v1356, 0.0
    %v1388 = vsel %vm341, %v1360, 0.0
    %v1389 = vsel %vm342, %v1356, 0.0
    %v1390 = vsel %vm343, %v1360, 0.0
    %v1391 = vsel %vm344, %v1356, 0.0
    %v1392 = vsel %vm345, %v1360, 0.0
    %v1393 = vsel %vm346, %v1356, 0.0
    %v1394 = vsel %vm347, %v1360, 0.0
    %v1395 = vadd.f32 %v1363, %v1364
    %1396 = vadd.xlane.f32.xlu0 %v1395
    %v1397 = vpop.xlane.xlu0 %1396
    %v1398 = vadd.f32 %v1365, %v1366
    %1399 = vadd.xlane.f32.xlu0 %v1398
    %v1400 = vpop.xlane.xlu0 %1399
    %v1401 = vadd.f32 %v1367, %v1368
    %1402 = vadd.xlane.f32.xlu0 %v1401
    %v1403 = vpop.xlane.xlu0 %1402
    %v1404 = vadd.f32 %v1369, %v1370
    %1405 = vadd.xlane.f32.xlu0 %v1404
    %v1406 = vpop.xlane.xlu0 %1405
    %v1407 = vadd.f32 %v1371, %v1372
    %1408 = vadd.xlane.f32.xlu0 %v1407
    %v1409 = vpop.xlane.xlu0 %1408
    %v1410 = vadd.f32 %v1373, %v1374
    %1411 = vadd.xlane.f32.xlu0 %v1410
    %v1412 = vpop.xlane.xlu0 %1411
    %v1413 = vadd.f32 %v1375, %v1376
    %1414 = vadd.xlane.f32.xlu0 %v1413
    %v1415 = vpop.xlane.xlu0 %1414
    %v1416 = vadd.f32 %v1377, %v1378
    %1417 = vadd.xlane.f32.xlu0 %v1416
    %v1418 = vpop.xlane.xlu0 %1417
    %v1419 = vadd.f32 %v1379, %v1380
    %1420 = vadd.xlane.f32.xlu0 %v1419
    %v1421 = vpop.xlane.xlu0 %1420
    %v1422 = vadd.f32 %v1381, %v1382
    %1423 = vadd.xlane.f32.xlu0 %v1422
    %v1424 = vpop.xlane.xlu0 %1423
    %v1425 = vadd.f32 %v1383, %v1384
    %1426 = vadd.xlane.f32.xlu0 %v1425
    %v1427 = vpop.xlane.xlu0 %1426
    %v1428 = vadd.f32 %v1385, %v1386
    %1429 = vadd.xlane.f32.xlu0 %v1428
    %v1430 = vpop.xlane.xlu0 %1429
    %v1431 = vadd.f32 %v1387, %v1388
    %1432 = vadd.xlane.f32.xlu0 %v1431
    %v1433 = vpop.xlane.xlu0 %1432
    %v1434 = vadd.f32 %v1389, %v1390
    %1435 = vadd.xlane.f32.xlu0 %v1434
    %v1436 = vpop.xlane.xlu0 %1435
    %v1437 = vadd.f32 %v1391, %v1392
    %1438 = vadd.xlane.f32.xlu0 %v1437
    %v1439 = vpop.xlane.xlu0 %1438
    %v1440 = vadd.f32 %v1393, %v1394
    %1441 = vadd.xlane.f32.xlu0 %v1440
    %v1442 = vpop.xlane.xlu0 %1441
    %vm1443 = vcmp.gt.f32.partialorder %v1397, %v1356
    %vm1444 = vcmp.gt.f32.partialorder %v1397, %v1360
    %vm1445 = vcmp.gt.f32.partialorder %v1400, %v1356
    %vm1446 = vcmp.gt.f32.partialorder %v1400, %v1360
    %vm1447 = vcmp.gt.f32.partialorder %v1403, %v1356
    %vm1448 = vcmp.gt.f32.partialorder %v1403, %v1360
    %vm1449 = vcmp.gt.f32.partialorder %v1406, %v1356
    %vm1450 = vcmp.gt.f32.partialorder %v1406, %v1360
    %vm1451 = vcmp.gt.f32.partialorder %v1409, %v1356
    %vm1452 = vcmp.gt.f32.partialorder %v1409, %v1360
    %vm1453 = vcmp.gt.f32.partialorder %v1412, %v1356
    %vm1454 = vcmp.gt.f32.partialorder %v1412, %v1360
    %vm1455 = vcmp.gt.f32.partialorder %v1415, %v1356
    %vm1456 = vcmp.gt.f32.partialorder %v1415, %v1360
    %vm1457 = vcmp.gt.f32.partialorder %v1418, %v1356
    %vm1458 = vcmp.gt.f32.partialorder %v1418, %v1360
    %vm1459 = vcmp.gt.f32.partialorder %v1421, %v1356
    %vm1460 = vcmp.gt.f32.partialorder %v1421, %v1360
    %vm1461 = vcmp.gt.f32.partialorder %v1424, %v1356
    %vm1462 = vcmp.gt.f32.partialorder %v1424, %v1360
    %vm1463 = vcmp.gt.f32.partialorder %v1427, %v1356
    %vm1464 = vcmp.gt.f32.partialorder %v1427, %v1360
    %vm1465 = vcmp.gt.f32.partialorder %v1430, %v1356
    %vm1466 = vcmp.gt.f32.partialorder %v1430, %v1360
    %vm1467 = vcmp.gt.f32.partialorder %v1433, %v1356
    %vm1468 = vcmp.gt.f32.partialorder %v1433, %v1360
    %vm1469 = vcmp.gt.f32.partialorder %v1436, %v1356
    %vm1470 = vcmp.gt.f32.partialorder %v1436, %v1360
    %vm1471 = vcmp.gt.f32.partialorder %v1439, %v1356
    %vm1472 = vcmp.gt.f32.partialorder %v1439, %v1360
    %vm1473 = vcmp.gt.f32.partialorder %v1442, %v1356
    %vm1474 = vcmp.gt.f32.partialorder %v1442, %v1360
    %vm1475 = vcmp.eq.f32.partialorder %v1397, %v1356
    %vm1476 = vcmp.eq.f32.partialorder %v1397, %v1360
    %vm1477 = vcmp.eq.f32.partialorder %v1400, %v1356
    %vm1478 = vcmp.eq.f32.partialorder %v1400, %v1360
    %vm1479 = vcmp.eq.f32.partialorder %v1403, %v1356
    %vm1480 = vcmp.eq.f32.partialorder %v1403, %v1360
    %vm1481 = vcmp.eq.f32.partialorder %v1406, %v1356
    %vm1482 = vcmp.eq.f32.partialorder %v1406, %v1360
    %vm1483 = vcmp.eq.f32.partialorder %v1409, %v1356
    %vm1484 = vcmp.eq.f32.partialorder %v1409, %v1360
    %vm1485 = vcmp.eq.f32.partialorder %v1412, %v1356
    %vm1486 = vcmp.eq.f32.partialorder %v1412, %v1360
    %vm1487 = vcmp.eq.f32.partialorder %v1415, %v1356
    %vm1488 = vcmp.eq.f32.partialorder %v1415, %v1360
    %vm1489 = vcmp.eq.f32.partialorder %v1418, %v1356
    %vm1490 = vcmp.eq.f32.partialorder %v1418, %v1360
    %vm1491 = vcmp.eq.f32.partialorder %v1421, %v1356
    %vm1492 = vcmp.eq.f32.partialorder %v1421, %v1360
    %vm1493 = vcmp.eq.f32.partialorder %v1424, %v1356
    %vm1494 = vcmp.eq.f32.partialorder %v1424, %v1360
    %vm1495 = vcmp.eq.f32.partialorder %v1427, %v1356
    %vm1496 = vcmp.eq.f32.partialorder %v1427, %v1360
    %vm1497 = vcmp.eq.f32.partialorder %v1430, %v1356
    %vm1498 = vcmp.eq.f32.partialorder %v1430, %v1360
    %vm1499 = vcmp.eq.f32.partialorder %v1433, %v1356
    %vm1500 = vcmp.eq.f32.partialorder %v1433, %v1360
    %vm1501 = vcmp.eq.f32.partialorder %v1436, %v1356
    %vm1502 = vcmp.eq.f32.partialorder %v1436, %v1360
    %vm1503 = vcmp.eq.f32.partialorder %v1439, %v1356
    %vm1504 = vcmp.eq.f32.partialorder %v1439, %v1360
    %vm1505 = vcmp.eq.f32.partialorder %v1442, %v1356
    %vm1506 = vcmp.eq.f32.partialorder %v1442, %v1360
    %vm1507 = vmand %vm1475, %vm492
    %vm1508 = vmand %vm1476, %vm493
    %vm1509 = vmand %vm1477, %vm494
    %vm1510 = vmand %vm1478, %vm495
    %vm1511 = vmand %vm1479, %vm496
    %vm1512 = vmand %vm1480, %vm497
    %vm1513 = vmand %vm1481, %vm498
    %vm1514 = vmand %vm1482, %vm499
    %vm1515 = vmand %vm1483, %vm500
    %vm1516 = vmand %vm1484, %vm501
    %vm1517 = vmand %vm1485, %vm502
    %vm1518 = vmand %vm1486, %vm503
    %vm1519 = vmand %vm1487, %vm504
    %vm1520 = vmand %vm1488, %vm505
    %vm1521 = vmand %vm1489, %vm506
    %vm1522 = vmand %vm1490, %vm507
    %vm1523 = vmand %vm1491, %vm508
    %vm1524 = vmand %vm1492, %vm509
    %vm1525 = vmand %vm1493, %vm510
    %vm1526 = vmand %vm1494, %vm511
    %vm1527 = vmand %vm1495, %vm512
    %vm1528 = vmand %vm1496, %vm513
    %vm1529 = vmand %vm1497, %vm514
    %vm1530 = vmand %vm1498, %vm515
    %vm1531 = vmand %vm1499, %vm516
    %vm1532 = vmand %vm1500, %vm517
    %vm1533 = vmand %vm1501, %vm518
    %vm1534 = vmand %vm1502, %vm519
    %vm1535 = vmand %vm1503, %vm520
    %vm1536 = vmand %vm1504, %vm521
    %vm1537 = vmand %vm1505, %vm522
    %vm1538 = vmand %vm1506, %vm523
    %vm1539 = vmor %vm1443, %vm1507
    %vm1540 = vmor %vm1444, %vm1508
    %vm1541 = vmor %vm1445, %vm1509
    %vm1542 = vmor %vm1446, %vm1510
    %vm1543 = vmor %vm1447, %vm1511
    %vm1544 = vmor %vm1448, %vm1512
    %vm1545 = vmor %vm1449, %vm1513
    %vm1546 = vmor %vm1450, %vm1514
    %vm1547 = vmor %vm1451, %vm1515
    %vm1548 = vmor %vm1452, %vm1516
    %vm1549 = vmor %vm1453, %vm1517
    %vm1550 = vmor %vm1454, %vm1518
    %vm1551 = vmor %vm1455, %vm1519
    %vm1552 = vmor %vm1456, %vm1520
    %vm1553 = vmor %vm1457, %vm1521
    %vm1554 = vmor %vm1458, %vm1522
    %vm1555 = vmor %vm1459, %vm1523
    %vm1556 = vmor %vm1460, %vm1524
    %vm1557 = vmor %vm1461, %vm1525
    %vm1558 = vmor %vm1462, %vm1526
    %vm1559 = vmor %vm1463, %vm1527
    %vm1560 = vmor %vm1464, %vm1528
    %vm1561 = vmor %vm1465, %vm1529
    %vm1562 = vmor %vm1466, %vm1530
    %vm1563 = vmor %vm1467, %vm1531
    %vm1564 = vmor %vm1468, %vm1532
    %vm1565 = vmor %vm1469, %vm1533
    %vm1566 = vmor %vm1470, %vm1534
    %vm1567 = vmor %vm1471, %vm1535
    %vm1568 = vmor %vm1472, %vm1536
    %vm1569 = vmor %vm1473, %vm1537
    %vm1570 = vmor %vm1474, %vm1538
    %v1571 = vsel %vm1539, 1, 0
    %v1572 = vsel %vm1540, 1, 0
    %v1573 = vsel %vm1541, 1, 0
    %v1574 = vsel %vm1542, 1, 0
    %v1575 = vsel %vm1543, 1, 0
    %v1576 = vsel %vm1544, 1, 0
    %v1577 = vsel %vm1545, 1, 0
    %v1578 = vsel %vm1546, 1, 0
    %v1579 = vsel %vm1547, 1, 0
    %v1580 = vsel %vm1548, 1, 0
    %v1581 = vsel %vm1549, 1, 0
    %v1582 = vsel %vm1550, 1, 0
    %v1583 = vsel %vm1551, 1, 0
    %v1584 = vsel %vm1552, 1, 0
    %v1585 = vsel %vm1553, 1, 0
    %v1586 = vsel %vm1554, 1, 0
    %v1587 = vsel %vm1555, 1, 0
    %v1588 = vsel %vm1556, 1, 0
    %v1589 = vsel %vm1557, 1, 0
    %v1590 = vsel %vm1558, 1, 0
    %v1591 = vsel %vm1559, 1, 0
    %v1592 = vsel %vm1560, 1, 0
    %v1593 = vsel %vm1561, 1, 0
    %v1594 = vsel %vm1562, 1, 0
    %v1595 = vsel %vm1563, 1, 0
    %v1596 = vsel %vm1564, 1, 0
    %v1597 = vsel %vm1565, 1, 0
    %v1598 = vsel %vm1566, 1, 0
    %v1599 = vsel %vm1567, 1, 0
    %v1600 = vsel %vm1568, 1, 0
    %v1601 = vsel %vm1569, 1, 0
    %v1602 = vsel %vm1570, 1, 0
    %v1603 = vcvt.s32.f32 %v1571
    %v1604 = vcvt.s32.f32 %v1572
    %v1605 = vcvt.s32.f32 %v1573
    %v1606 = vcvt.s32.f32 %v1574
    %v1607 = vcvt.s32.f32 %v1575
    %v1608 = vcvt.s32.f32 %v1576
    %v1609 = vcvt.s32.f32 %v1577
    %v1610 = vcvt.s32.f32 %v1578
    %v1611 = vcvt.s32.f32 %v1579
    %v1612 = vcvt.s32.f32 %v1580
    %v1613 = vcvt.s32.f32 %v1581
    %v1614 = vcvt.s32.f32 %v1582
    %v1615 = vcvt.s32.f32 %v1583
    %v1616 = vcvt.s32.f32 %v1584
    %v1617 = vcvt.s32.f32 %v1585
    %v1618 = vcvt.s32.f32 %v1586
    %v1619 = vcvt.s32.f32 %v1587
    %v1620 = vcvt.s32.f32 %v1588
    %v1621 = vcvt.s32.f32 %v1589
    %v1622 = vcvt.s32.f32 %v1590
    %v1623 = vcvt.s32.f32 %v1591
    %v1624 = vcvt.s32.f32 %v1592
    %v1625 = vcvt.s32.f32 %v1593
    %v1626 = vcvt.s32.f32 %v1594
    %v1627 = vcvt.s32.f32 %v1595
    %v1628 = vcvt.s32.f32 %v1596
    %v1629 = vcvt.s32.f32 %v1597
    %v1630 = vcvt.s32.f32 %v1598
    %v1631 = vcvt.s32.f32 %v1599
    %v1632 = vcvt.s32.f32 %v1600
    %v1633 = vcvt.s32.f32 %v1601
    %v1634 = vcvt.s32.f32 %v1602
    %v1635 = vpack.c.bf16 %v1605, %v1603
    %v1636 = vpack.c.bf16 %v1606, %v1604
    %v1637 = vpack.c.bf16 %v1609, %v1607
    %v1638 = vpack.c.bf16 %v1610, %v1608
    %v1639 = vpack.c.bf16 %v1613, %v1611
    %v1640 = vpack.c.bf16 %v1614, %v1612
    %v1641 = vpack.c.bf16 %v1617, %v1615
    %v1642 = vpack.c.bf16 %v1618, %v1616
    %v1643 = vpack.c.bf16 %v1621, %v1619
    %v1644 = vpack.c.bf16 %v1622, %v1620
    %v1645 = vpack.c.bf16 %v1625, %v1623
    %v1646 = vpack.c.bf16 %v1626, %v1624
    %v1647 = vpack.c.bf16 %v1629, %v1627
    %v1648 = vpack.c.bf16 %v1630, %v1628
    %v1649 = vpack.c.bf16 %v1633, %v1631
    %v1650 = vpack.c.bf16 %v1634, %v1632
    %v1651 = vsel %vm684, %v1356, 0.0
    %v1652 = vsel %vm685, %v1360, 0.0
    %v1653 = vsel %vm686, %v1356, 0.0
    %v1654 = vsel %vm687, %v1360, 0.0
    %v1655 = vsel %vm688, %v1356, 0.0
    %v1656 = vsel %vm689, %v1360, 0.0
    %v1657 = vsel %vm690, %v1356, 0.0
    %v1658 = vsel %vm691, %v1360, 0.0
    %v1659 = vsel %vm692, %v1356, 0.0
    %v1660 = vsel %vm693, %v1360, 0.0
    %v1661 = vsel %vm694, %v1356, 0.0
    %v1662 = vsel %vm695, %v1360, 0.0
    %v1663 = vsel %vm696, %v1356, 0.0
    %v1664 = vsel %vm697, %v1360, 0.0
    %v1665 = vsel %vm698, %v1356, 0.0
    %v1666 = vsel %vm699, %v1360, 0.0
    %v1667 = vsel %vm700, %v1356, 0.0
    %v1668 = vsel %vm701, %v1360, 0.0
    %v1669 = vsel %vm702, %v1356, 0.0
    %v1670 = vsel %vm703, %v1360, 0.0
    %v1671 = vsel %vm704, %v1356, 0.0
    %v1672 = vsel %vm705, %v1360, 0.0
    %v1673 = vsel %vm706, %v1356, 0.0
    %v1674 = vsel %vm707, %v1360, 0.0
    %v1675 = vsel %vm708, %v1356, 0.0
    %v1676 = vsel %vm709, %v1360, 0.0
    %v1677 = vsel %vm710, %v1356, 0.0
    %v1678 = vsel %vm711, %v1360, 0.0
    %v1679 = vsel %vm712, %v1356, 0.0
    %v1680 = vsel %vm713, %v1360, 0.0
    %v1681 = vsel %vm714, %v1356, 0.0
    %v1682 = vsel %vm715, %v1360, 0.0
    %v1683 = vadd.f32 %v1651, %v1652
    %1684 = vadd.xlane.f32.xlu0 %v1683
    %v1685 = vpop.xlane.xlu0 %1684
    %v1686 = vadd.f32 %v1653, %v1654
    %1687 = vadd.xlane.f32.xlu0 %v1686
    %v1688 = vpop.xlane.xlu0 %1687
    %v1689 = vadd.f32 %v1655, %v1656
    %1690 = vadd.xlane.f32.xlu0 %v1689
    %v1691 = vpop.xlane.xlu0 %1690
    %v1692 = vadd.f32 %v1657, %v1658
    %1693 = vadd.xlane.f32.xlu0 %v1692
    %v1694 = vpop.xlane.xlu0 %1693
    %v1695 = vadd.f32 %v1659, %v1660
    %1696 = vadd.xlane.f32.xlu0 %v1695
    %v1697 = vpop.xlane.xlu0 %1696
    %v1698 = vadd.f32 %v1661, %v1662
    %1699 = vadd.xlane.f32.xlu0 %v1698
    %v1700 = vpop.xlane.xlu0 %1699
    %v1701 = vadd.f32 %v1663, %v1664
    %1702 = vadd.xlane.f32.xlu0 %v1701
    %v1703 = vpop.xlane.xlu0 %1702
    %v1704 = vadd.f32 %v1665, %v1666
    %1705 = vadd.xlane.f32.xlu0 %v1704
    %v1706 = vpop.xlane.xlu0 %1705
    %v1707 = vadd.f32 %v1667, %v1668
    %1708 = vadd.xlane.f32.xlu0 %v1707
    %v1709 = vpop.xlane.xlu0 %1708
    %v1710 = vadd.f32 %v1669, %v1670
    %1711 = vadd.xlane.f32.xlu0 %v1710
    %v1712 = vpop.xlane.xlu0 %1711
    %v1713 = vadd.f32 %v1671, %v1672
    %1714 = vadd.xlane.f32.xlu0 %v1713
    %v1715 = vpop.xlane.xlu0 %1714
    %v1716 = vadd.f32 %v1673, %v1674
    %1717 = vadd.xlane.f32.xlu0 %v1716
    %v1718 = vpop.xlane.xlu0 %1717
    %v1719 = vadd.f32 %v1675, %v1676
    %1720 = vadd.xlane.f32.xlu0 %v1719
    %v1721 = vpop.xlane.xlu0 %1720
    %v1722 = vadd.f32 %v1677, %v1678
    %1723 = vadd.xlane.f32.xlu0 %v1722
    %v1724 = vpop.xlane.xlu0 %1723
    %v1725 = vadd.f32 %v1679, %v1680
    %1726 = vadd.xlane.f32.xlu0 %v1725
    %v1727 = vpop.xlane.xlu0 %1726
    %v1728 = vadd.f32 %v1681, %v1682
    %1729 = vadd.xlane.f32.xlu0 %v1728
    %v1730 = vpop.xlane.xlu0 %1729
    %vm1731 = vcmp.gt.f32.partialorder %v1685, %v1356
    %vm1732 = vcmp.gt.f32.partialorder %v1685, %v1360
    %vm1733 = vcmp.gt.f32.partialorder %v1688, %v1356
    %vm1734 = vcmp.gt.f32.partialorder %v1688, %v1360
    %vm1735 = vcmp.gt.f32.partialorder %v1691, %v1356
    %vm1736 = vcmp.gt.f32.partialorder %v1691, %v1360
    %vm1737 = vcmp.gt.f32.partialorder %v1694, %v1356
    %vm1738 = vcmp.gt.f32.partialorder %v1694, %v1360
    %vm1739 = vcmp.gt.f32.partialorder %v1697, %v1356
    %vm1740 = vcmp.gt.f32.partialorder %v1697, %v1360
    %vm1741 = vcmp.gt.f32.partialorder %v1700, %v1356
    %vm1742 = vcmp.gt.f32.partialorder %v1700, %v1360
    %vm1743 = vcmp.gt.f32.partialorder %v1703, %v1356
    %vm1744 = vcmp.gt.f32.partialorder %v1703, %v1360
    %vm1745 = vcmp.gt.f32.partialorder %v1706, %v1356
    %vm1746 = vcmp.gt.f32.partialorder %v1706, %v1360
    %vm1747 = vcmp.gt.f32.partialorder %v1709, %v1356
    %vm1748 = vcmp.gt.f32.partialorder %v1709, %v1360
    %vm1749 = vcmp.gt.f32.partialorder %v1712, %v1356
    %vm1750 = vcmp.gt.f32.partialorder %v1712, %v1360
    %vm1751 = vcmp.gt.f32.partialorder %v1715, %v1356
    %vm1752 = vcmp.gt.f32.partialorder %v1715, %v1360
    %vm1753 = vcmp.gt.f32.partialorder %v1718, %v1356
    %vm1754 = vcmp.gt.f32.partialorder %v1718, %v1360
    %vm1755 = vcmp.gt.f32.partialorder %v1721, %v1356
    %vm1756 = vcmp.gt.f32.partialorder %v1721, %v1360
    %vm1757 = vcmp.gt.f32.partialorder %v1724, %v1356
    %vm1758 = vcmp.gt.f32.partialorder %v1724, %v1360
    %vm1759 = vcmp.gt.f32.partialorder %v1727, %v1356
    %vm1760 = vcmp.gt.f32.partialorder %v1727, %v1360
    %vm1761 = vcmp.gt.f32.partialorder %v1730, %v1356
    %vm1762 = vcmp.gt.f32.partialorder %v1730, %v1360
    %vm1763 = vcmp.eq.f32.partialorder %v1685, %v1356
    %vm1764 = vcmp.eq.f32.partialorder %v1685, %v1360
    %vm1765 = vcmp.eq.f32.partialorder %v1688, %v1356
    %vm1766 = vcmp.eq.f32.partialorder %v1688, %v1360
    %vm1767 = vcmp.eq.f32.partialorder %v1691, %v1356
    %vm1768 = vcmp.eq.f32.partialorder %v1691, %v1360
    %vm1769 = vcmp.eq.f32.partialorder %v1694, %v1356
    %vm1770 = vcmp.eq.f32.partialorder %v1694, %v1360
    %vm1771 = vcmp.eq.f32.partialorder %v1697, %v1356
    %vm1772 = vcmp.eq.f32.partialorder %v1697, %v1360
    %vm1773 = vcmp.eq.f32.partialorder %v1700, %v1356
    %vm1774 = vcmp.eq.f32.partialorder %v1700, %v1360
    %vm1775 = vcmp.eq.f32.partialorder %v1703, %v1356
    %vm1776 = vcmp.eq.f32.partialorder %v1703, %v1360
    %vm1777 = vcmp.eq.f32.partialorder %v1706, %v1356
    %vm1778 = vcmp.eq.f32.partialorder %v1706, %v1360
    %vm1779 = vcmp.eq.f32.partialorder %v1709, %v1356
    %vm1780 = vcmp.eq.f32.partialorder %v1709, %v1360
    %vm1781 = vcmp.eq.f32.partialorder %v1712, %v1356
    %vm1782 = vcmp.eq.f32.partialorder %v1712, %v1360
    %vm1783 = vcmp.eq.f32.partialorder %v1715, %v1356
    %vm1784 = vcmp.eq.f32.partialorder %v1715, %v1360
    %vm1785 = vcmp.eq.f32.partialorder %v1718, %v1356
    %vm1786 = vcmp.eq.f32.partialorder %v1718, %v1360
    %vm1787 = vcmp.eq.f32.partialorder %v1721, %v1356
    %vm1788 = vcmp.eq.f32.partialorder %v1721, %v1360
    %vm1789 = vcmp.eq.f32.partialorder %v1724, %v1356
    %vm1790 = vcmp.eq.f32.partialorder %v1724, %v1360
    %vm1791 = vcmp.eq.f32.partialorder %v1727, %v1356
    %vm1792 = vcmp.eq.f32.partialorder %v1727, %v1360
    %vm1793 = vcmp.eq.f32.partialorder %v1730, %v1356
    %vm1794 = vcmp.eq.f32.partialorder %v1730, %v1360
    %vm1795 = vmand %vm1763, %vm860
    %vm1796 = vmand %vm1764, %vm861
    %vm1797 = vmand %vm1765, %vm862
    %vm1798 = vmand %vm1766, %vm863
    %vm1799 = vmand %vm1767, %vm864
    %vm1800 = vmand %vm1768, %vm865
    %vm1801 = vmand %vm1769, %vm866
    %vm1802 = vmand %vm1770, %vm867
    %vm1803 = vmand %vm1771, %vm868
    %vm1804 = vmand %vm1772, %vm869
    %vm1805 = vmand %vm1773, %vm870
    %vm1806 = vmand %vm1774, %vm871
    %vm1807 = vmand %vm1775, %vm872
    %vm1808 = vmand %vm1776, %vm873
    %vm1809 = vmand %vm1777, %vm874
    %vm1810 = vmand %vm1778, %vm875
    %vm1811 = vmand %vm1779, %vm876
    %vm1812 = vmand %vm1780, %vm877
    %vm1813 = vmand %vm1781, %vm878
    %vm1814 = vmand %vm1782, %vm879
    %vm1815 = vmand %vm1783, %vm880
    %vm1816 = vmand %vm1784, %vm881
    %vm1817 = vmand %vm1785, %vm882
    %vm1818 = vmand %vm1786, %vm883
    %vm1819 = vmand %vm1787, %vm884
    %vm1820 = vmand %vm1788, %vm885
    %vm1821 = vmand %vm1789, %vm886
    %vm1822 = vmand %vm1790, %vm887
    %vm1823 = vmand %vm1791, %vm888
    %vm1824 = vmand %vm1792, %vm889
    %vm1825 = vmand %vm1793, %vm890
    %vm1826 = vmand %vm1794, %vm891
    %vm1827 = vmor %vm1731, %vm1795
    %vm1828 = vmor %vm1732, %vm1796
    %vm1829 = vmor %vm1733, %vm1797
    %vm1830 = vmor %vm1734, %vm1798
    %vm1831 = vmor %vm1735, %vm1799
    %vm1832 = vmor %vm1736, %vm1800
    %vm1833 = vmor %vm1737, %vm1801
    %vm1834 = vmor %vm1738, %vm1802
    %vm1835 = vmor %vm1739, %vm1803
    %vm1836 = vmor %vm1740, %vm1804
    %vm1837 = vmor %vm1741, %vm1805
    %vm1838 = vmor %vm1742, %vm1806
    %vm1839 = vmor %vm1743, %vm1807
    %vm1840 = vmor %vm1744, %vm1808
    %vm1841 = vmor %vm1745, %vm1809
    %vm1842 = vmor %vm1746, %vm1810
    %vm1843 = vmor %vm1747, %vm1811
    %vm1844 = vmor %vm1748, %vm1812
    %vm1845 = vmor %vm1749, %vm1813
    %vm1846 = vmor %vm1750, %vm1814
    %vm1847 = vmor %vm1751, %vm1815
    %vm1848 = vmor %vm1752, %vm1816
    %vm1849 = vmor %vm1753, %vm1817
    %vm1850 = vmor %vm1754, %vm1818
    %vm1851 = vmor %vm1755, %vm1819
    %vm1852 = vmor %vm1756, %vm1820
    %vm1853 = vmor %vm1757, %vm1821
    %vm1854 = vmor %vm1758, %vm1822
    %vm1855 = vmor %vm1759, %vm1823
    %vm1856 = vmor %vm1760, %vm1824
    %vm1857 = vmor %vm1761, %vm1825
    %vm1858 = vmor %vm1762, %vm1826
    %v1859 = vsel %vm1827, 1, 0
    %v1860 = vsel %vm1828, 1, 0
    %v1861 = vsel %vm1829, 1, 0
    %v1862 = vsel %vm1830, 1, 0
    %v1863 = vsel %vm1831, 1, 0
    %v1864 = vsel %vm1832, 1, 0
    %v1865 = vsel %vm1833, 1, 0
    %v1866 = vsel %vm1834, 1, 0
    %v1867 = vsel %vm1835, 1, 0
    %v1868 = vsel %vm1836, 1, 0
    %v1869 = vsel %vm1837, 1, 0
    %v1870 = vsel %vm1838, 1, 0
    %v1871 = vsel %vm1839, 1, 0
    %v1872 = vsel %vm1840, 1, 0
    %v1873 = vsel %vm1841, 1, 0
    %v1874 = vsel %vm1842, 1, 0
    %v1875 = vsel %vm1843, 1, 0
    %v1876 = vsel %vm1844, 1, 0
    %v1877 = vsel %vm1845, 1, 0
    %v1878 = vsel %vm1846, 1, 0
    %v1879 = vsel %vm1847, 1, 0
    %v1880 = vsel %vm1848, 1, 0
    %v1881 = vsel %vm1849, 1, 0
    %v1882 = vsel %vm1850, 1, 0
    %v1883 = vsel %vm1851, 1, 0
    %v1884 = vsel %vm1852, 1, 0
    %v1885 = vsel %vm1853, 1, 0
    %v1886 = vsel %vm1854, 1, 0
    %v1887 = vsel %vm1855, 1, 0
    %v1888 = vsel %vm1856, 1, 0
    %v1889 = vsel %vm1857, 1, 0
    %v1890 = vsel %vm1858, 1, 0
    %v1891 = vcvt.s32.f32 %v1859
    %v1892 = vcvt.s32.f32 %v1860
    %v1893 = vcvt.s32.f32 %v1861
    %v1894 = vcvt.s32.f32 %v1862
    %v1895 = vcvt.s32.f32 %v1863
    %v1896 = vcvt.s32.f32 %v1864
    %v1897 = vcvt.s32.f32 %v1865
    %v1898 = vcvt.s32.f32 %v1866
    %v1899 = vcvt.s32.f32 %v1867
    %v1900 = vcvt.s32.f32 %v1868
    %v1901 = vcvt.s32.f32 %v1869
    %v1902 = vcvt.s32.f32 %v1870
    %v1903 = vcvt.s32.f32 %v1871
    %v1904 = vcvt.s32.f32 %v1872
    %v1905 = vcvt.s32.f32 %v1873
    %v1906 = vcvt.s32.f32 %v1874
    %v1907 = vcvt.s32.f32 %v1875
    %v1908 = vcvt.s32.f32 %v1876
    %v1909 = vcvt.s32.f32 %v1877
    %v1910 = vcvt.s32.f32 %v1878
    %v1911 = vcvt.s32.f32 %v1879
    %v1912 = vcvt.s32.f32 %v1880
    %v1913 = vcvt.s32.f32 %v1881
    %v1914 = vcvt.s32.f32 %v1882
    %v1915 = vcvt.s32.f32 %v1883
    %v1916 = vcvt.s32.f32 %v1884
    %v1917 = vcvt.s32.f32 %v1885
    %v1918 = vcvt.s32.f32 %v1886
    %v1919 = vcvt.s32.f32 %v1887
    %v1920 = vcvt.s32.f32 %v1888
    %v1921 = vcvt.s32.f32 %v1889
    %v1922 = vcvt.s32.f32 %v1890
    %v1923 = vpack.c.bf16 %v1893, %v1891
    %v1924 = vpack.c.bf16 %v1894, %v1892
    %v1925 = vpack.c.bf16 %v1897, %v1895
    %v1926 = vpack.c.bf16 %v1898, %v1896
    %v1927 = vpack.c.bf16 %v1901, %v1899
    %v1928 = vpack.c.bf16 %v1902, %v1900
    %v1929 = vpack.c.bf16 %v1905, %v1903
    %v1930 = vpack.c.bf16 %v1906, %v1904
    %v1931 = vpack.c.bf16 %v1909, %v1907
    %v1932 = vpack.c.bf16 %v1910, %v1908
    %v1933 = vpack.c.bf16 %v1913, %v1911
    %v1934 = vpack.c.bf16 %v1914, %v1912
    %v1935 = vpack.c.bf16 %v1917, %v1915
    %v1936 = vpack.c.bf16 %v1918, %v1916
    %v1937 = vpack.c.bf16 %v1921, %v1919
    %v1938 = vpack.c.bf16 %v1922, %v1920
    %1939 = vmatprep.subr.bf16.mxu0 %v1924
    %1940 = vmatpush1.bf16.msra.mxu0 %v1923
    %1941 = vmatprep.subr.bf16.mxu0 %v1926
    %1942 = vmatpush1.bf16.msra.mxu0 %v1925
    %1943 = vmatprep.subr.bf16.mxu0 %v1928
    %1944 = vmatpush1.bf16.msra.mxu0 %v1927
    %1945 = vmatprep.subr.bf16.mxu0 %v1930
    %1946 = vmatpush1.bf16.msra.mxu0 %v1929
    %1947 = vmatprep.subr.bf16.mxu0 %v1932
    %1948 = vmatpush1.bf16.msra.mxu0 %v1931
    %1949 = vmatprep.subr.bf16.mxu0 %v1934
    %1950 = vmatpush1.bf16.msra.mxu0 %v1933
    %1951 = vmatprep.subr.bf16.mxu0 %v1936
    %1952 = vmatpush1.bf16.msra.mxu0 %v1935
    %1953 = vmatprep.subr.bf16.mxu0 %v1938
    %1954 = vmatpush1.bf16.msra.mxu0 %v1937
    %1955 = vmatprep.subr.bf16.mxu0 0
    %1956 = vmatpush1.bf16.msra.mxu0 0
    %1957 = vmatprep.subr.bf16.mxu0 0
    %1958 = vmatpush1.bf16.msra.mxu0 0
    %1959 = vmatprep.subr.bf16.mxu0 0
    %1960 = vmatpush1.bf16.msra.mxu0 0
    %1961 = vmatprep.subr.bf16.mxu0 0
    %1962 = vmatpush1.bf16.msra.mxu0 0
    %1963 = vmatprep.subr.bf16.mxu0 0
    %1964 = vmatpush1.bf16.msra.mxu0 0
    %1965 = vmatprep.subr.bf16.mxu0 0
    %1966 = vmatpush1.bf16.msra.mxu0 0
    %1967 = vmatprep.subr.bf16.mxu0 0
    %1968 = vmatpush1.bf16.msra.mxu0 0
    %1969 = vmatprep.subr.bf16.mxu0 0
    %1970 = vmatpush1.bf16.msra.mxu0 0
    %1971 = vmatprep.mubr.bf16.mxu0 0
    %1972 = vmatmul.mubr.bf16.gmra.mrb[0].mxu0 1065369472
    %v1973 = vpop.f32.mrb[0].mxu0
    %v1974 = vadd.f32 0.0, %v1973
    %v1975 = vpop.f32.mrb[0].mxu0
    %v1976 = vadd.f32 0.0, %v1975
    %v1977 = vpop.f32.mrb[0].mxu0
    %v1978 = vpop.f32.mrb[0].mxu0
    %1979 = vdwg.mxu0
    %1980 = vmatprep.subr.bf16.mxu0 %v1636
    %1981 = vmatpush1.bf16.msra.mxu0 %v1635
    %1982 = vmatprep.subr.bf16.mxu0 %v1638
    %1983 = vmatpush1.bf16.msra.mxu0 %v1637
    %1984 = vmatprep.subr.bf16.mxu0 %v1640
    %1985 = vmatpush1.bf16.msra.mxu0 %v1639
    %1986 = vmatprep.subr.bf16.mxu0 %v1642
    %1987 = vmatpush1.bf16.msra.mxu0 %v1641
    %1988 = vmatprep.subr.bf16.mxu0 %v1644
    %1989 = vmatpush1.bf16.msra.mxu0 %v1643
    %1990 = vmatprep.subr.bf16.mxu0 %v1646
    %1991 = vmatpush1.bf16.msra.mxu0 %v1645
    %1992 = vmatprep.subr.bf16.mxu0 %v1648
    %1993 = vmatpush1.bf16.msra.mxu0 %v1647
    %1994 = vmatprep.subr.bf16.mxu0 %v1650
    %1995 = vmatpush1.bf16.msra.mxu0 %v1649
    %1996 = vmatprep.subr.bf16.mxu0 0
    %1997 = vmatpush1.bf16.msra.mxu0 0
    %1998 = vmatprep.subr.bf16.mxu0 0
    %1999 = vmatpush1.bf16.msra.mxu0 0
    %2000 = vmatprep.subr.bf16.mxu0 0
    %2001 = vmatpush1.bf16.msra.mxu0 0
    %2002 = vmatprep.subr.bf16.mxu0 0
    %2003 = vmatpush1.bf16.msra.mxu0 0
    %2004 = vmatprep.subr.bf16.mxu0 0
    %2005 = vmatpush1.bf16.msra.mxu0 0
    %2006 = vmatprep.subr.bf16.mxu0 0
    %2007 = vmatpush1.bf16.msra.mxu0 0
    %2008 = vmatprep.subr.bf16.mxu0 0
    %2009 = vmatpush1.bf16.msra.mxu0 0
    %2010 = vmatprep.subr.bf16.mxu0 0
    %2011 = vmatpush1.bf16.msra.mxu0 0
    %2012 = vmatprep.mubr.bf16.mxu0 0
    %2013 = vmatmul.mubr.bf16.gmra.mrb[0].mxu0 1065369472
    %v2014 = vpop.f32.mrb[0].mxu0
    %v2015 = vadd.f32 %v1974, %v2014
    %v2016 = vpop.f32.mrb[0].mxu0
    %v2017 = vadd.f32 %v1976, %v2016
    %v2018 = vpop.f32.mrb[0].mxu0
    %v2019 = vpop.f32.mrb[0].mxu0
    %2020 = vdwg.mxu0
    %v2021 = vstv %s1351
    %vm2022 = vcmp.lt.f32.partialorder %v2015, %v2021
    %vm2023 = vcmp.lt.f32.partialorder %v2017, %v2021
    %v2024 = vsel %vm2022, 1, 0
    %v2025 = vsel %vm2023, 1, 0
    %v2026 = vcvt.s32.f32 %v2024
    %v2027 = vcvt.s32.f32 %v2025
    %v2028 = vmul.f32 %v1285, %v2026
    %v2029 = vmul.f32 %v1286, %v2027
    %v2030 = vsel %vm113, %v2028, 0.0
    %v2031 = vsel %vm113, %v2029, 0.0
    %v2032 = vadd.f32 %v2030, %v2031
    %2033 = vadd.xlane.f32.xlu0 %v2032
    %v2034 = vpop.xlane.xlu0 %2033
    %v2035 = vrot.slane %v2034, 4
    %v2036 = vadd.f32 %v2034, %v2035
    %v2037 = vrot.slane %v2036, 2
    %v2038 = vadd.f32 %v2036, %v2037
    %v2039 = vrot.slane %v2038, 1
    %v2040 = vadd.f32 %v2038, %v2039
    %s2041 = vtos %v2040
    %s2042 = sadd.f32 %s1330, %s2041
    %p2043 = scmp.gt.f32.partialorder %s1177, 0.0
    %s2044 = scalar_select %p2043, 1, 0
    %s2045 = scvt.s32.f32 %s2044
    %s2046 = smax.f32 %s1177, 1e-06
    %s2047 = smul.f32 %s2042, %s2045
    %v2048 = vstv %s2046
    %v2049 = vrcp.pop %v2048
    %s2050 = vtos %v2049
    %s2051 = smul.f32 %s2047, %s2050
    %s2052 = sadd.f32 %s1149, %s2051
    %v2053 = vstv %s2052
    %2054 = vst [vmem:[#allocation10] sm:$0x1] %v2053
    // Predicated region
    $region38: #{tpu_custom_call.1} parent=1 // pred_check
      _
    $region39: #{tpu_custom_call.1} parent=1 // pred_check_branch
      %2056 = sbr.rel (0) target = $region41
    $region40: #{tpu_custom_call.1} parent=1 // pred_region
      %s2058 = ssub.s32 16, 16
      %2059 = vsyncadd [#allocation4], %s2058
      %s2061 = sshll.u32 [#allocation10], 4
      %s2062 = int_to_ptr.vmem [resolvable:$true] %s2061
      %2064 = dma.vmem_to_hbm [thread:$0]  %s2062, 16, %s5, [#allocation4]
    $region41: #{tpu_custom_call.1} parent=1 // pred_fallthru
      _
    // Predicated region
    $region42: #{tpu_custom_call.1} parent=1 // pred_check
      _
    $region43: #{tpu_custom_call.1} parent=1 // pred_check_branch
      %2066 = sbr.rel (0) target = $region45
    $region44: #{tpu_custom_call.1} parent=1 // pred_region
      %2067 = dma.done [#allocation4], 16
    $region45: #{tpu_custom_call.1} parent=1 // pred_fallthru
      _
    %2068 = vsyncpa [#allocation3], 1
    %2069 = vsyncpa [#allocation6], 1
    %2070 = vsyncpa [#allocation9], 1
    %2071 = vsyncpa [#allocation4], 1

</llo_original>
